<compile_context>
chip_gen: v7x
topology: tpu7x:2x2x1
jax: 0.10.0
libtpu: 0.0.40
codegen_flags: <defaults>
</compile_context>

<pallas_src>
import functools

import jax
import jax.numpy as jnp
from jax.experimental import pallas as pl
from jax.experimental.pallas import tpu as pltpu

LEAKY_SLOPE = 0.1      # the module calls F.leaky_relu(x, negative_slope=0.1)
NORM_EPS = 1e-12       # F.normalize(p=2, dim=1) default eps

# MXU input dtype. f32 here for exact parity at tiny sizes; set to jnp.bfloat16
# on v6e/v7x for the large-N path (f32 accumulation is kept either way, and the
# scale/shift + LeakyReLU + rsqrt chain stays f32 -> no bf16 VPU/EUP on v5e).
MXU_DTYPE = jnp.float32


# ----------------------------------------------------------------------------
# Fused Pallas kernel: conv1+BN1+LReLU -> conv2+BN2+LReLU -> conv3+L2norm
# ----------------------------------------------------------------------------
def _rgcn_fused_kernel(x_ref, a_ref, w_ref, t_ref, out_ref, *, n_slices):
    """Fused 3-layer RGCN forward (eval mode), fully VMEM-resident.

    x_ref : (N, C)           node features, zero-padded to C = Cmax
    a_ref : ((R+1)*N, N)     shared adjacency slab: block 0 = I (self-loop),
                             blocks 1..R = mean-normalized per-relation adjacency
    w_ref : (3, (R+1)*C, C)  per-layer weight slab; sublane block k is the
                             effective weight for adjacency block k (root /
                             relation), with basis 'comp' and eval-BN scale
                             folded in host-side, zero-padded to CxC
    t_ref : (3, 1, C)        per-layer additive shift (conv bias + BN shift)
    out_ref: (N, out_dim)
    """
    n = x_ref.shape[0]
    c = x_ref.shape[1]
    out_dim = out_ref.shape[1]

    def conv(h, layer):
        # ONE MXU aggregation pass over self-loop + all R relations (identity
        # block makes the root term ride the same matmul).
        msg = jnp.dot(a_ref[...], h.astype(a_ref.dtype),
                      preferred_element_type=jnp.float32)       # ((R+1)*N, C)
        w_l = w_ref[layer]                                      # ((R+1)*C, C), one load
        # Static tiny unrolled loop applying per-block effective weights.
        # TODO(synk): collapse into one wide-K dot (lane-concat of msg blocks
        # to (N,(R+1)*C)) once unaligned lane concatenation is guaranteed.
        acc = None
        for k in range(n_slices):
            part = jnp.dot(msg[k * n:(k + 1) * n, :].astype(w_l.dtype),
                           w_l[k * c:(k + 1) * c, :],
                           preferred_element_type=jnp.float32)
            acc = part if acc is None else acc + part
        return acc

    h = x_ref[...].astype(jnp.float32)

    # layer 1: conv -> (+ folded bias/BN shift) -> LeakyReLU ; dropout = identity (eval)
    h = conv(h, 0) + t_ref[0]
    h = jnp.where(h >= 0.0, h, LEAKY_SLOPE * h)

    # layer 2: conv -> (+ folded bias/BN shift) -> LeakyReLU
    h = conv(h, 1) + t_ref[1]
    h = jnp.where(h >= 0.0, h, LEAKY_SLOPE * h)

    # layer 3: conv (+ bias) -> F.normalize(p=2, dim=1).  Padded output columns
    # are exactly zero, so the norm over C equals the norm over out_dim.
    h = conv(h, 2) + t_ref[2]
    sq = jnp.sum(h * h, axis=1, keepdims=True)
    inv = jax.lax.rsqrt(jnp.maximum(sq, NORM_EPS * NORM_EPS))   # EUP, free under MXU slack
    out_ref[...] = (h * inv)[:, :out_dim]


def rgcn_fused(x_pad, a_aug, w_all, shifts, out_dim):
    """x_pad: (N, C); a_aug: ((R+1)*N, N); w_all: (3, (R+1)*C, C); shifts: (3,1,C)."""
    n = x_pad.shape[0]
    n_slices = a_aug.shape[0] // n
    vmem = pl.BlockSpec(memory_space=pltpu.MemorySpace.VMEM)
    # No grid: the whole problem (~90 KiB) fits one VMEM tile set, so grid steps
    # would only add launch/DMA overhead.  Large-N path (not needed here): tile
    # the output-node axis with a ("parallel",) grid to use v7x's 2 TensorCores,
    # keep the lane dim a multiple of 128, cast MXU operands to bf16, and size
    # the resident adjacency against v7x's 64 MiB VMEM (half of v5e/v6e),
    # setting pltpu.CompilerParams(vmem_limit_bytes=...) explicitly.
    return pl.pallas_call(
        functools.partial(_rgcn_fused_kernel, n_slices=n_slices),
        out_shape=jax.ShapeDtypeStruct((n, out_dim), jnp.float32),
        in_specs=[vmem, vmem, vmem, vmem],
        out_specs=vmem,
    )(x_pad, a_aug, w_all, shifts)


@functools.partial(jax.jit, static_argnames=("out_dim",))
def rgcn_forward(x_pad, a_aug, w_all, shifts, out_dim):
    return rgcn_fused(x_pad, a_aug, w_all, shifts, out_dim)


# ----------------------------------------------------------------------------
# One-time host-side prep (hoisted out of the per-forward path)
# ----------------------------------------------------------------------------
def build_adjacency_slab(edge_index, edge_type, num_nodes, num_relations):
    """Shared ((R+1)*N, N) slab: block 0 = I (root/self-loop); blocks 1..R =
    per-relation adjacency with PyG RGCNConv 'mean' aggregation normalization:
        A[r, i, j] = (#edges j->i of relation r) / (#edges of relation r into i).
    Built ONCE per graph; identical for all three conv layers.
    TODO(synk): replace the dense O(R*N^2) XLA scatter with a CSR/segment-sum
    path (scalar-prefetch page table) for real graph sizes.
    """
    src, dst = edge_index[0], edge_index[1]          # messages flow src -> dst
    counts = jnp.zeros((num_relations, num_nodes, num_nodes), jnp.float32)
    counts = counts.at[edge_type, dst, src].add(1.0)
    deg = counts.sum(axis=2, keepdims=True)
    adj = jnp.where(deg > 0, counts / jnp.where(deg > 0, deg, 1.0), 0.0)
    eye = jnp.eye(num_nodes, dtype=jnp.float32)[None]
    slab = jnp.concatenate([eye, adj], axis=0)
    return slab.reshape((num_relations + 1) * num_nodes, num_nodes).astype(MXU_DTYPE)


def pack_params(conv_params, bn_params, cmax):
    """Fold basis 'comp' into per-relation weights, fold eval-BN scale into the
    weights and BN shift + conv bias into a single additive shift, then pack all
    layers into ONE weight slab (3, (R+1)*Cmax, Cmax) and ONE shift slab
    (3, 1, Cmax) -> 4 prologue DMAs total for the fused kernel."""
    w_slabs, t_slabs = [], []
    for l, p in enumerate(conv_params):
        ci, co = p["root"].shape
        w_rel = jnp.einsum("rb,bio->rio", p["comp"], p["basis"])   # (R, ci, co)
        w_aug = jnp.concatenate([p["root"][None], w_rel], axis=0)  # (R+1, ci, co)
        bias = p["bias"]                                           # (1, co)
        if l < len(bn_params):
            # bn(z + bias) = z * scale + (bias * scale + shift); scale -> weights
            s = bn_params[l]["scale"]                              # (1, co)
            w_aug = w_aug * s[None, :, :]
            t = bias * s + bn_params[l]["shift"]
        else:
            t = bias
        nslc = w_aug.shape[0]
        w_pad = jnp.zeros((nslc, cmax, cmax), jnp.float32).at[:, :ci, :co].set(w_aug)
        w_slabs.append(w_pad.reshape(nslc * cmax, cmax))
        t_slabs.append(jnp.zeros((1, 1, cmax), jnp.float32).at[:, :, :co].set(t[None]))
    return (jnp.stack(w_slabs, axis=0).astype(MXU_DTYPE),
            jnp.concatenate(t_slabs, axis=0))


def _glorot(key, shape):
    fan_in, fan_out = shape[-2], shape[-1]
    a = jnp.sqrt(6.0 / (fan_in + fan_out))
    return jax.random.uniform(key, shape, jnp.float32, minval=-a, maxval=a)


def init_rgcn_params(key, in_dim, hidden_dim, out_dim, num_relations, num_bases):
    """Deterministic parameter init matching the module's shapes."""
    dims = [(in_dim, hidden_dim), (hidden_dim, hidden_dim), (hidden_dim, out_dim)]
    params = []
    for (ci, co) in dims:
        key, k1, k2, k3 = jax.random.split(key, 4)
        params.append(dict(
            basis=_glorot(k1, (num_bases, ci, co)),        # (B, Cin, Cout)
            comp=_glorot(k2, (num_relations, num_bases)),  # (R, B)
            root=_glorot(k3, (ci, co)),
            bias=jnp.zeros((1, co), jnp.float32),
        ))
    # BatchNorm1d (eval mode, default init) expressed as scale/shift
    eps = 1e-5
    bn = []
    for c in (hidden_dim, hidden_dim):
        gamma = jnp.ones((1, c), jnp.float32)
        beta = jnp.zeros((1, c), jnp.float32)
        running_mean = jnp.zeros((1, c), jnp.float32)
        running_var = jnp.ones((1, c), jnp.float32)
        scale = gamma / jnp.sqrt(running_var + eps)
        shift = beta - running_mean * scale
        bn.append(dict(scale=scale, shift=shift))
    return params, bn


# ----------------------------------------------------------------------------
# Main
# ----------------------------------------------------------------------------
if __name__ == "__main__":
    N = 32              # number of nodes
    IN_DIM = 16
    HIDDEN_DIM = 32
    OUT_DIM = 16
    NUM_RELATIONS = 4
    NUM_BASES = 2       # basis sharing (< num_relations)
    E = 64              # number of edges

    key = jax.random.PRNGKey(0)
    kx, ksrc, kdst, ktyp, kpar = jax.random.split(key, 5)

    x = jax.random.normal(kx, (N, IN_DIM), jnp.float32)
    src = jax.random.randint(ksrc, (E,), 0, N)
    dst = jax.random.randint(kdst, (E,), 0, N)
    edge_index = jnp.stack([src, dst], axis=0)                 # (2, E)
    edge_type = jax.random.randint(ktyp, (E,), 0, NUM_RELATIONS)

    conv_params, bn_params = init_rgcn_params(
        kpar, IN_DIM, HIDDEN_DIM, OUT_DIM, NUM_RELATIONS, NUM_BASES)

    # --- one-time prep: adjacency slab, packed/folded weights, padded features
    CMAX = max(IN_DIM, HIDDEN_DIM, OUT_DIM)
    a_aug = build_adjacency_slab(edge_index, edge_type, N, NUM_RELATIONS)
    w_all, shifts = pack_params(conv_params, bn_params, CMAX)
    x_pad = jnp.zeros((N, CMAX), jnp.float32).at[:, :IN_DIM].set(x)

    # --- fused forward (single pallas_call, 4 input operands) -----------------
    out = rgcn_forward(x_pad, a_aug, w_all, shifts, out_dim=OUT_DIM)
    jax.block_until_ready(out)

    assert out.shape == (N, OUT_DIM)
    assert bool(jnp.all(jnp.isfinite(out)))
    print("KERNEL_OK")
</pallas_src>

<mosaic_0001>
module attributes {stable_mosaic.version = 11 : i64} {
  func.func @_rgcn_fused_kernel(%arg0: memref<32x32xf32, #tpu.memory_space<vmem>>, %arg1: memref<160x32xf32, #tpu.memory_space<vmem>>, %arg2: memref<3x160x32xf32, #tpu.memory_space<vmem>>, %arg3: memref<3x1x32xf32, #tpu.memory_space<vmem>>, %arg4: memref<32x16xf32, #tpu.memory_space<vmem>>) attributes {dimension_semantics = [], scalar_prefetch = 0 : i64, scratch_operands = 0 : i64, tpu.core_type = #tpu.core_type<tc>} {
    %c0 = arith.constant 0 : index
    %c0_0 = arith.constant 0 : index
    %0 = vector.load %arg0[%c0, %c0_0] : memref<32x32xf32, #tpu.memory_space<vmem>>, vector<32x32xf32>
    %c0_1 = arith.constant 0 : index
    %c0_2 = arith.constant 0 : index
    %1 = vector.load %arg1[%c0_1, %c0_2] : memref<160x32xf32, #tpu.memory_space<vmem>>, vector<160x32xf32>
    %cst = arith.constant dense<0.000000e+00> : vector<160x32xf32>
    %2 = tpu.matmul %1, %0, %cst {dimension_numbers = #tpu.dot_dimension_numbers<[1], [0], [0], [1], [0, 0, 1, 1], [], []>} : vector<160x32xf32>, vector<32x32xf32>, vector<160x32xf32> -> vector<160x32xf32>
    %c0_3 = arith.constant 0 : index
    %c0_4 = arith.constant 0 : index
    %c0_5 = arith.constant 0 : index
    %3 = vector.load %arg2[%c0_3, %c0_4, %c0_5] : memref<3x160x32xf32, #tpu.memory_space<vmem>>, vector<1x160x32xf32>
    %4 = vector.shape_cast %3 : vector<1x160x32xf32> to vector<160x32xf32>
    %5 = vector.extract_strided_slice %2 {offsets = [0, 0], sizes = [32, 32], strides = [1, 1]} : vector<160x32xf32> to vector<32x32xf32>
    %6 = vector.extract_strided_slice %4 {offsets = [0, 0], sizes = [32, 32], strides = [1, 1]} : vector<160x32xf32> to vector<32x32xf32>
    %cst_6 = arith.constant dense<0.000000e+00> : vector<32x32xf32>
    %7 = tpu.matmul %5, %6, %cst_6 {dimension_numbers = #tpu.dot_dimension_numbers<[1], [0], [0], [1], [0, 0, 1, 1], [], []>} : vector<32x32xf32>, vector<32x32xf32>, vector<32x32xf32> -> vector<32x32xf32>
    %8 = vector.extract_strided_slice %2 {offsets = [32, 0], sizes = [32, 32], strides = [1, 1]} : vector<160x32xf32> to vector<32x32xf32>
    %9 = vector.extract_strided_slice %4 {offsets = [32, 0], sizes = [32, 32], strides = [1, 1]} : vector<160x32xf32> to vector<32x32xf32>
    %cst_7 = arith.constant dense<0.000000e+00> : vector<32x32xf32>
    %10 = tpu.matmul %8, %9, %cst_7 {dimension_numbers = #tpu.dot_dimension_numbers<[1], [0], [0], [1], [0, 0, 1, 1], [], []>} : vector<32x32xf32>, vector<32x32xf32>, vector<32x32xf32> -> vector<32x32xf32>
    %11 = arith.addf %7, %10 : vector<32x32xf32>
    %12 = vector.extract_strided_slice %2 {offsets = [64, 0], sizes = [32, 32], strides = [1, 1]} : vector<160x32xf32> to vector<32x32xf32>
    %13 = vector.extract_strided_slice %4 {offsets = [64, 0], sizes = [32, 32], strides = [1, 1]} : vector<160x32xf32> to vector<32x32xf32>
    %cst_8 = arith.constant dense<0.000000e+00> : vector<32x32xf32>
    %14 = tpu.matmul %12, %13, %cst_8 {dimension_numbers = #tpu.dot_dimension_numbers<[1], [0], [0], [1], [0, 0, 1, 1], [], []>} : vector<32x32xf32>, vector<32x32xf32>, vector<32x32xf32> -> vector<32x32xf32>
    %15 = arith.addf %11, %14 : vector<32x32xf32>
    %16 = vector.extract_strided_slice %2 {offsets = [96, 0], sizes = [32, 32], strides = [1, 1]} : vector<160x32xf32> to vector<32x32xf32>
    %17 = vector.extract_strided_slice %4 {offsets = [96, 0], sizes = [32, 32], strides = [1, 1]} : vector<160x32xf32> to vector<32x32xf32>
    %cst_9 = arith.constant dense<0.000000e+00> : vector<32x32xf32>
    %18 = tpu.matmul %16, %17, %cst_9 {dimension_numbers = #tpu.dot_dimension_numbers<[1], [0], [0], [1], [0, 0, 1, 1], [], []>} : vector<32x32xf32>, vector<32x32xf32>, vector<32x32xf32> -> vector<32x32xf32>
    %19 = arith.addf %15, %18 : vector<32x32xf32>
    %20 = vector.extract_strided_slice %2 {offsets = [128, 0], sizes = [32, 32], strides = [1, 1]} : vector<160x32xf32> to vector<32x32xf32>
    %21 = vector.extract_strided_slice %4 {offsets = [128, 0], sizes = [32, 32], strides = [1, 1]} : vector<160x32xf32> to vector<32x32xf32>
    %cst_10 = arith.constant dense<0.000000e+00> : vector<32x32xf32>
    %22 = tpu.matmul %20, %21, %cst_10 {dimension_numbers = #tpu.dot_dimension_numbers<[1], [0], [0], [1], [0, 0, 1, 1], [], []>} : vector<32x32xf32>, vector<32x32xf32>, vector<32x32xf32> -> vector<32x32xf32>
    %23 = arith.addf %19, %22 : vector<32x32xf32>
    %c0_11 = arith.constant 0 : index
    %c0_12 = arith.constant 0 : index
    %c0_13 = arith.constant 0 : index
    %24 = vector.load %arg3[%c0_11, %c0_12, %c0_13] : memref<3x1x32xf32, #tpu.memory_space<vmem>>, vector<1x1x32xf32>
    %25 = vector.shape_cast %24 : vector<1x1x32xf32> to vector<1x32xf32>
    %26 = vector.broadcast %25 : vector<1x32xf32> to vector<32x32xf32>
    %27 = arith.addf %23, %26 : vector<32x32xf32>
    %cst_14 = arith.constant 0.000000e+00 : f32
    %28 = vector.broadcast %cst_14 : f32 to vector<32x32xf32>
    %29 = arith.cmpf oge, %27, %28 : vector<32x32xf32>
    %cst_15 = arith.constant 1.000000e-01 : f32
    %30 = vector.broadcast %cst_15 : f32 to vector<32x32xf32>
    %31 = arith.mulf %30, %27 : vector<32x32xf32>
    %32 = arith.select %29, %27, %31 : vector<32x32xi1>, vector<32x32xf32>
    %c0_16 = arith.constant 0 : index
    %c0_17 = arith.constant 0 : index
    %33 = vector.load %arg1[%c0_16, %c0_17] : memref<160x32xf32, #tpu.memory_space<vmem>>, vector<160x32xf32>
    %cst_18 = arith.constant dense<0.000000e+00> : vector<160x32xf32>
    %34 = tpu.matmul %33, %32, %cst_18 {dimension_numbers = #tpu.dot_dimension_numbers<[1], [0], [0], [1], [0, 0, 1, 1], [], []>} : vector<160x32xf32>, vector<32x32xf32>, vector<160x32xf32> -> vector<160x32xf32>
    %c1 = arith.constant 1 : index
    %c0_19 = arith.constant 0 : index
    %c0_20 = arith.constant 0 : index
    %35 = vector.load %arg2[%c1, %c0_19, %c0_20] : memref<3x160x32xf32, #tpu.memory_space<vmem>>, vector<1x160x32xf32>
    %36 = vector.shape_cast %35 : vector<1x160x32xf32> to vector<160x32xf32>
    %37 = vector.extract_strided_slice %34 {offsets = [0, 0], sizes = [32, 32], strides = [1, 1]} : vector<160x32xf32> to vector<32x32xf32>
    %38 = vector.extract_strided_slice %36 {offsets = [0, 0], sizes = [32, 32], strides = [1, 1]} : vector<160x32xf32> to vector<32x32xf32>
    %cst_21 = arith.constant dense<0.000000e+00> : vector<32x32xf32>
    %39 = tpu.matmul %37, %38, %cst_21 {dimension_numbers = #tpu.dot_dimension_numbers<[1], [0], [0], [1], [0, 0, 1, 1], [], []>} : vector<32x32xf32>, vector<32x32xf32>, vector<32x32xf32> -> vector<32x32xf32>
    %40 = vector.extract_strided_slice %34 {offsets = [32, 0], sizes = [32, 32], strides = [1, 1]} : vector<160x32xf32> to vector<32x32xf32>
    %41 = vector.extract_strided_slice %36 {offsets = [32, 0], sizes = [32, 32], strides = [1, 1]} : vector<160x32xf32> to vector<32x32xf32>
    %cst_22 = arith.constant dense<0.000000e+00> : vector<32x32xf32>
    %42 = tpu.matmul %40, %41, %cst_22 {dimension_numbers = #tpu.dot_dimension_numbers<[1], [0], [0], [1], [0, 0, 1, 1], [], []>} : vector<32x32xf32>, vector<32x32xf32>, vector<32x32xf32> -> vector<32x32xf32>
    %43 = arith.addf %39, %42 : vector<32x32xf32>
    %44 = vector.extract_strided_slice %34 {offsets = [64, 0], sizes = [32, 32], strides = [1, 1]} : vector<160x32xf32> to vector<32x32xf32>
    %45 = vector.extract_strided_slice %36 {offsets = [64, 0], sizes = [32, 32], strides = [1, 1]} : vector<160x32xf32> to vector<32x32xf32>
    %cst_23 = arith.constant dense<0.000000e+00> : vector<32x32xf32>
    %46 = tpu.matmul %44, %45, %cst_23 {dimension_numbers = #tpu.dot_dimension_numbers<[1], [0], [0], [1], [0, 0, 1, 1], [], []>} : vector<32x32xf32>, vector<32x32xf32>, vector<32x32xf32> -> vector<32x32xf32>
    %47 = arith.addf %43, %46 : vector<32x32xf32>
    %48 = vector.extract_strided_slice %34 {offsets = [96, 0], sizes = [32, 32], strides = [1, 1]} : vector<160x32xf32> to vector<32x32xf32>
    %49 = vector.extract_strided_slice %36 {offsets = [96, 0], sizes = [32, 32], strides = [1, 1]} : vector<160x32xf32> to vector<32x32xf32>
    %cst_24 = arith.constant dense<0.000000e+00> : vector<32x32xf32>
    %50 = tpu.matmul %48, %49, %cst_24 {dimension_numbers = #tpu.dot_dimension_numbers<[1], [0], [0], [1], [0, 0, 1, 1], [], []>} : vector<32x32xf32>, vector<32x32xf32>, vector<32x32xf32> -> vector<32x32xf32>
    %51 = arith.addf %47, %50 : vector<32x32xf32>
    %52 = vector.extract_strided_slice %34 {offsets = [128, 0], sizes = [32, 32], strides = [1, 1]} : vector<160x32xf32> to vector<32x32xf32>
    %53 = vector.extract_strided_slice %36 {offsets = [128, 0], sizes = [32, 32], strides = [1, 1]} : vector<160x32xf32> to vector<32x32xf32>
    %cst_25 = arith.constant dense<0.000000e+00> : vector<32x32xf32>
    %54 = tpu.matmul %52, %53, %cst_25 {dimension_numbers = #tpu.dot_dimension_numbers<[1], [0], [0], [1], [0, 0, 1, 1], [], []>} : vector<32x32xf32>, vector<32x32xf32>, vector<32x32xf32> -> vector<32x32xf32>
    %55 = arith.addf %51, %54 : vector<32x32xf32>
    %c1_26 = arith.constant 1 : index
    %c0_27 = arith.constant 0 : index
    %c0_28 = arith.constant 0 : index
    %56 = vector.load %arg3[%c1_26, %c0_27, %c0_28] : memref<3x1x32xf32, #tpu.memory_space<vmem>>, vector<1x1x32xf32>
    %57 = vector.shape_cast %56 : vector<1x1x32xf32> to vector<1x32xf32>
    %58 = vector.broadcast %57 : vector<1x32xf32> to vector<32x32xf32>
    %59 = arith.addf %55, %58 : vector<32x32xf32>
    %cst_29 = arith.constant 0.000000e+00 : f32
    %60 = vector.broadcast %cst_29 : f32 to vector<32x32xf32>
    %61 = arith.cmpf oge, %59, %60 : vector<32x32xf32>
    %cst_30 = arith.constant 1.000000e-01 : f32
    %62 = vector.broadcast %cst_30 : f32 to vector<32x32xf32>
    %63 = arith.mulf %62, %59 : vector<32x32xf32>
    %64 = arith.select %61, %59, %63 : vector<32x32xi1>, vector<32x32xf32>
    %c0_31 = arith.constant 0 : index
    %c0_32 = arith.constant 0 : index
    %65 = vector.load %arg1[%c0_31, %c0_32] : memref<160x32xf32, #tpu.memory_space<vmem>>, vector<160x32xf32>
    %cst_33 = arith.constant dense<0.000000e+00> : vector<160x32xf32>
    %66 = tpu.matmul %65, %64, %cst_33 {dimension_numbers = #tpu.dot_dimension_numbers<[1], [0], [0], [1], [0, 0, 1, 1], [], []>} : vector<160x32xf32>, vector<32x32xf32>, vector<160x32xf32> -> vector<160x32xf32>
    %c2 = arith.constant 2 : index
    %c0_34 = arith.constant 0 : index
    %c0_35 = arith.constant 0 : index
    %67 = vector.load %arg2[%c2, %c0_34, %c0_35] : memref<3x160x32xf32, #tpu.memory_space<vmem>>, vector<1x160x32xf32>
    %68 = vector.shape_cast %67 : vector<1x160x32xf32> to vector<160x32xf32>
    %69 = vector.extract_strided_slice %66 {offsets = [0, 0], sizes = [32, 32], strides = [1, 1]} : vector<160x32xf32> to vector<32x32xf32>
    %70 = vector.extract_strided_slice %68 {offsets = [0, 0], sizes = [32, 32], strides = [1, 1]} : vector<160x32xf32> to vector<32x32xf32>
    %cst_36 = arith.constant dense<0.000000e+00> : vector<32x32xf32>
    %71 = tpu.matmul %69, %70, %cst_36 {dimension_numbers = #tpu.dot_dimension_numbers<[1], [0], [0], [1], [0, 0, 1, 1], [], []>} : vector<32x32xf32>, vector<32x32xf32>, vector<32x32xf32> -> vector<32x32xf32>
    %72 = vector.extract_strided_slice %66 {offsets = [32, 0], sizes = [32, 32], strides = [1, 1]} : vector<160x32xf32> to vector<32x32xf32>
    %73 = vector.extract_strided_slice %68 {offsets = [32, 0], sizes = [32, 32], strides = [1, 1]} : vector<160x32xf32> to vector<32x32xf32>
    %cst_37 = arith.constant dense<0.000000e+00> : vector<32x32xf32>
    %74 = tpu.matmul %72, %73, %cst_37 {dimension_numbers = #tpu.dot_dimension_numbers<[1], [0], [0], [1], [0, 0, 1, 1], [], []>} : vector<32x32xf32>, vector<32x32xf32>, vector<32x32xf32> -> vector<32x32xf32>
    %75 = arith.addf %71, %74 : vector<32x32xf32>
    %76 = vector.extract_strided_slice %66 {offsets = [64, 0], sizes = [32, 32], strides = [1, 1]} : vector<160x32xf32> to vector<32x32xf32>
    %77 = vector.extract_strided_slice %68 {offsets = [64, 0], sizes = [32, 32], strides = [1, 1]} : vector<160x32xf32> to vector<32x32xf32>
    %cst_38 = arith.constant dense<0.000000e+00> : vector<32x32xf32>
    %78 = tpu.matmul %76, %77, %cst_38 {dimension_numbers = #tpu.dot_dimension_numbers<[1], [0], [0], [1], [0, 0, 1, 1], [], []>} : vector<32x32xf32>, vector<32x32xf32>, vector<32x32xf32> -> vector<32x32xf32>
    %79 = arith.addf %75, %78 : vector<32x32xf32>
    %80 = vector.extract_strided_slice %66 {offsets = [96, 0], sizes = [32, 32], strides = [1, 1]} : vector<160x32xf32> to vector<32x32xf32>
    %81 = vector.extract_strided_slice %68 {offsets = [96, 0], sizes = [32, 32], strides = [1, 1]} : vector<160x32xf32> to vector<32x32xf32>
    %cst_39 = arith.constant dense<0.000000e+00> : vector<32x32xf32>
    %82 = tpu.matmul %80, %81, %cst_39 {dimension_numbers = #tpu.dot_dimension_numbers<[1], [0], [0], [1], [0, 0, 1, 1], [], []>} : vector<32x32xf32>, vector<32x32xf32>, vector<32x32xf32> -> vector<32x32xf32>
    %83 = arith.addf %79, %82 : vector<32x32xf32>
    %84 = vector.extract_strided_slice %66 {offsets = [128, 0], sizes = [32, 32], strides = [1, 1]} : vector<160x32xf32> to vector<32x32xf32>
    %85 = vector.extract_strided_slice %68 {offsets = [128, 0], sizes = [32, 32], strides = [1, 1]} : vector<160x32xf32> to vector<32x32xf32>
    %cst_40 = arith.constant dense<0.000000e+00> : vector<32x32xf32>
    %86 = tpu.matmul %84, %85, %cst_40 {dimension_numbers = #tpu.dot_dimension_numbers<[1], [0], [0], [1], [0, 0, 1, 1], [], []>} : vector<32x32xf32>, vector<32x32xf32>, vector<32x32xf32> -> vector<32x32xf32>
    %87 = arith.addf %83, %86 : vector<32x32xf32>
    %c2_41 = arith.constant 2 : index
    %c0_42 = arith.constant 0 : index
    %c0_43 = arith.constant 0 : index
    %88 = vector.load %arg3[%c2_41, %c0_42, %c0_43] : memref<3x1x32xf32, #tpu.memory_space<vmem>>, vector<1x1x32xf32>
    %89 = vector.shape_cast %88 : vector<1x1x32xf32> to vector<1x32xf32>
    %90 = vector.broadcast %89 : vector<1x32xf32> to vector<32x32xf32>
    %91 = arith.addf %87, %90 : vector<32x32xf32>
    %92 = arith.mulf %91, %91 : vector<32x32xf32>
    %cst_44 = arith.constant dense<0.000000e+00> : vector<32xf32>
    %93 = vector.multi_reduction <add>, %92, %cst_44 [1] : vector<32x32xf32> to vector<32xf32>
    %94 = vector.shape_cast %93 : vector<32xf32> to vector<32x1xf32>
    %cst_45 = arith.constant 1.000000e-24 : f32
    %95 = vector.broadcast %cst_45 : f32 to vector<32x1xf32>
    %96 = arith.maximumf %94, %95 : vector<32x1xf32>
    %97 = math.rsqrt %96 : vector<32x1xf32>
    %98 = vector.broadcast %97 : vector<32x1xf32> to vector<32x32xf32>
    %99 = arith.mulf %91, %98 : vector<32x32xf32>
    %100 = vector.extract_strided_slice %99 {offsets = [0, 0], sizes = [32, 16], strides = [1, 1]} : vector<32x32xf32> to vector<32x16xf32>
    %c0_46 = arith.constant 0 : index
    %c0_47 = arith.constant 0 : index
    %101 = vector.load %arg4[%c0_46, %c0_47] : memref<32x16xf32, #tpu.memory_space<vmem>>, vector<32x16xf32>
    tpu.vector_store %arg4[%c0_46, %c0_47], %100 {strides = array<i32>} : memref<32x16xf32, #tpu.memory_space<vmem>>, vector<32x16xf32>,
    return
  }
}

</mosaic_0001>

<llo_original>
// kernel: rgcn_forward.1
$region0: #{rgcn_forward.1}
  #allocation0 [shape = 'u32[]', space=smem, size = 0x4, offset = 0x4, fixed_abs, tag = 'smem constant byte address 0x4 - core index']
  #allocation1 [shape = 'u32[144,128]{1,0:T(1,128)}', space=vmem, size = 0x12000, scoped, tag = 'internal scratch']
  %s0 = inlined_call_operand.vmem [shape: f32[32,32], index: 0, kind: input, shape index: {}]
  %s1 = inlined_call_operand.vmem [shape: f32[160,32], index: 1, kind: input, shape index: {}]
  %s2 = inlined_call_operand.vmem [shape: f32[3,160,32], index: 2, kind: input, shape index: {}]
  %s3 = inlined_call_operand.vmem [shape: f32[3,1,32], index: 3, kind: input, shape index: {}]
  %s4 = inlined_call_operand.vmem [shape: f32[32,16], index: 4, kind: output, shape index: {}]
  %s5 = sld [smem:[#allocation0]]
  $region26: #{rgcn_forward.1} parent=0
    _
  %s7 = ssub.s32 1, %s5
  %s8 = scalar_select 0, %s7, %s5
  // Predicated region
  $region2: #{rgcn_forward.1} parent=0 // pred_check
    _
  $region3: #{rgcn_forward.1} parent=0 // pred_check_branch
    %10 = sbr.rel (0) target = $region5
  $region4: #{rgcn_forward.1} parent=0 // pred_region
    _
  $region5: #{rgcn_forward.1} parent=0 // pred_fallthru
    _
  // Predicated region
  $region6: #{rgcn_forward.1} parent=0 // pred_check
    _
  $region7: #{rgcn_forward.1} parent=0 // pred_check_branch
    %12 = sbr.rel (0) target = $region9
  $region8: #{rgcn_forward.1} parent=0 // pred_region
    _
  $region9: #{rgcn_forward.1} parent=0 // pred_fallthru
    _
  // Predicated region
  $region10: #{rgcn_forward.1} parent=0 // pred_check
    _
  $region11: #{rgcn_forward.1} parent=0 // pred_check_branch
    %14 = sbr.rel (0) target = $region13
  $region12: #{rgcn_forward.1} parent=0 // pred_region
    _
  $region13: #{rgcn_forward.1} parent=0 // pred_fallthru
    _
  // Predicated region
  $region14: #{rgcn_forward.1} parent=0 // pred_check
    _
  $region15: #{rgcn_forward.1} parent=0 // pred_check_branch
    %16 = sbr.rel (0) target = $region17
  $region16: #{rgcn_forward.1} parent=0 // pred_region
    _
  $region17: #{rgcn_forward.1} parent=0 // pred_fallthru
    _
  %v17 = vld [vmem:[%s0] sm:$0xff]
  %v18 = vld [vmem:[%s0 + $0x8] sm:$0xff]
  %v19 = vld [vmem:[%s0 + $0x10] sm:$0xff]
  %v20 = vld [vmem:[%s0 + $0x18] sm:$0xff]
  %v21 = vld [vmem:[%s1] sm:$0xff]
  %v22 = vld [vmem:[%s1 + $0x8] sm:$0xff]
  %v23 = vld [vmem:[%s1 + $0x10] sm:$0xff]
  %v24 = vld [vmem:[%s1 + $0x18] sm:$0xff]
  %v25 = vld [vmem:[%s1 + $0x20] sm:$0xff]
  %v26 = vld [vmem:[%s1 + $0x28] sm:$0xff]
  %v27 = vld [vmem:[%s1 + $0x30] sm:$0xff]
  %v28 = vld [vmem:[%s1 + $0x38] sm:$0xff]
  %v29 = vld [vmem:[%s1 + $0x40] sm:$0xff]
  %v30 = vld [vmem:[%s1 + $0x48] sm:$0xff]
  %v31 = vld [vmem:[%s1 + $0x50] sm:$0xff]
  %v32 = vld [vmem:[%s1 + $0x58] sm:$0xff]
  %v33 = vld [vmem:[%s1 + $0x60] sm:$0xff]
  %v34 = vld [vmem:[%s1 + $0x68] sm:$0xff]
  %v35 = vld [vmem:[%s1 + $0x70] sm:$0xff]
  %v36 = vld [vmem:[%s1 + $0x78] sm:$0xff]
  %v37 = vld [vmem:[%s1 + $0x80] sm:$0xff]
  %v38 = vld [vmem:[%s1 + $0x88] sm:$0xff]
  %v39 = vld [vmem:[%s1 + $0x90] sm:$0xff]
  %v40 = vld [vmem:[%s1 + $0x98] sm:$0xff]
  %vm41 = vcmask 261120
  %v43 = vsel %vm41, %v21, 0
  %v46 = vsel %vm41, %v22, 0
  %v49 = vsel %vm41, %v23, 0
  %v52 = vsel %vm41, %v24, 0
  %v55 = vsel %vm41, %v25, 0
  %v58 = vsel %vm41, %v26, 0
  %v61 = vsel %vm41, %v27, 0
  %v64 = vsel %vm41, %v28, 0
  %v67 = vsel %vm41, %v29, 0
  %v70 = vsel %vm41, %v30, 0
  %v73 = vsel %vm41, %v31, 0
  %v76 = vsel %vm41, %v32, 0
  %v79 = vsel %vm41, %v33, 0
  %v82 = vsel %vm41, %v34, 0
  %v85 = vsel %vm41, %v35, 0
  %v88 = vsel %vm41, %v36, 0
  %v91 = vsel %vm41, %v37, 0
  %v94 = vsel %vm41, %v38, 0
  %v97 = vsel %vm41, %v39, 0
  %v100 = vsel %vm41, %v40, 0
  %102 = vmatprep.subr.mxu0 0.0
  %103 = vmatpush1.msra.mxu0 %v17
  %104 = vmatprep.subr.mxu0 0.0
  %105 = vmatpush1.msra.mxu0 %v18
  %106 = vmatprep.subr.mxu0 0.0
  %107 = vmatpush1.msra.mxu0 %v19
  %108 = vmatprep.subr.mxu0 0.0
  %109 = vmatpush1.msra.mxu0 %v20
  %110 = vmatprep.subr.mxu0 0.0
  %111 = vmatpush1.msra.mxu0 0.0
  %112 = vmatprep.subr.mxu0 0.0
  %113 = vmatpush1.msra.mxu0 0.0
  %114 = vmatprep.subr.mxu0 0.0
  %115 = vmatpush1.msra.mxu0 0.0
  %116 = vmatprep.subr.mxu0 0.0
  %117 = vmatpush1.msra.mxu0 0.0
  %118 = vmatprep.subr.mxu0 0.0
  %119 = vmatpush1.msra.mxu0 0.0
  %120 = vmatprep.subr.mxu0 0.0
  %121 = vmatpush1.msra.mxu0 0.0
  %122 = vmatprep.subr.mxu0 0.0
  %123 = vmatpush1.msra.mxu0 0.0
  %124 = vmatprep.subr.mxu0 0.0
  %125 = vmatpush1.msra.mxu0 0.0
  %126 = vmatprep.subr.mxu0 0.0
  %127 = vmatpush1.msra.mxu0 0.0
  %128 = vmatprep.subr.mxu0 0.0
  %129 = vmatpush1.msra.mxu0 0.0
  %130 = vmatprep.subr.mxu0 0.0
  %131 = vmatpush1.msra.mxu0 0.0
  %132 = vmatprep.subr.mxu0 0.0
  %133 = vmatpush1.msra.mxu0 0.0
  %134 = vmatprep.subr.mxu0 0.0
  %135 = vmatpush1.msra.mxu0 0.0
  %136 = vmatprep.subr.mxu0 0.0
  %137 = vmatpush1.msra.mxu0 0.0
  %138 = vmatprep.subr.mxu0 0.0
  %139 = vmatpush1.msra.mxu0 0.0
  %140 = vmatprep.subr.mxu0 0.0
  %141 = vmatpush1.msra.mxu0 0.0
  %142 = vmatprep.subr.mxu0 0.0
  %143 = vmatpush1.msra.mxu0 0.0
  %144 = vmatprep.subr.mxu0 0.0
  %145 = vmatpush1.msra.mxu0 0.0
  %146 = vmatprep.subr.mxu0 0.0
  %147 = vmatpush1.msra.mxu0 0.0
  %148 = vmatprep.subr.mxu0 0.0
  %149 = vmatpush1.msra.mxu0 0.0
  %150 = vmatprep.subr.mxu0 0.0
  %151 = vmatpush1.msra.mxu0 0.0
  %152 = vmatprep.subr.mxu0 0.0
  %153 = vmatpush1.msra.mxu0 0.0
  %154 = vmatprep.subr.mxu0 0.0
  %155 = vmatpush1.msra.mxu0 0.0
  %156 = vmatprep.subr.mxu0 0.0
  %157 = vmatpush1.msra.mxu0 0.0
  %158 = vmatprep.subr.mxu0 0.0
  %159 = vmatpush1.msra.mxu0 0.0
  %160 = vmatprep.subr.mxu0 0.0
  %161 = vmatpush1.msra.mxu0 0.0
  %162 = vmatprep.subr.mxu0 0.0
  %163 = vmatpush1.msra.mxu0 0.0
  %164 = vmatprep.subr.mxu0 0.0
  %165 = vmatpush1.msra.mxu0 0.0
  %166 = vmatprep.mubr.f32.mxu0 0.0
  %167 = vmatmul.mubr.f32.gmra.mrb[0].mxu0 %v43
  %v168 = vpop.f32.mrb[0].mxu0
  %v169 = vadd.f32 0.0, %v168
  %v170 = vpop.f32.mrb[0].mxu0
  %171 = vmatprep.mubr.f32.mxu0 0.0
  %172 = vmatmul.mubr.f32.gmra.mrb[0].mxu0 %v46
  %v173 = vpop.f32.mrb[0].mxu0
  %v174 = vadd.f32 0.0, %v173
  %v175 = vpop.f32.mrb[0].mxu0
  %176 = vmatprep.mubr.f32.mxu0 0.0
  %177 = vmatmul.mubr.f32.gmra.mrb[0].mxu0 %v49
  %v178 = vpop.f32.mrb[0].mxu0
  %v179 = vadd.f32 0.0, %v178
  %v180 = vpop.f32.mrb[0].mxu0
  %181 = vmatprep.mubr.f32.mxu0 0.0
  %182 = vmatmul.mubr.f32.gmra.mrb[0].mxu0 %v52
  %v183 = vpop.f32.mrb[0].mxu0
  %v184 = vadd.f32 0.0, %v183
  %v185 = vpop.f32.mrb[0].mxu0
  %186 = vmatprep.mubr.f32.mxu0 0.0
  %187 = vmatmul.mubr.f32.gmra.mrb[0].mxu0 %v55
  %v188 = vpop.f32.mrb[0].mxu0
  %v189 = vadd.f32 0.0, %v188
  %v190 = vpop.f32.mrb[0].mxu0
  %191 = vmatprep.mubr.f32.mxu0 0.0
  %192 = vmatmul.mubr.f32.gmra.mrb[0].mxu0 %v58
  %v193 = vpop.f32.mrb[0].mxu0
  %v194 = vadd.f32 0.0, %v193
  %v195 = vpop.f32.mrb[0].mxu0
  %196 = vmatprep.mubr.f32.mxu0 0.0
  %197 = vmatmul.mubr.f32.gmra.mrb[0].mxu0 %v61
  %v198 = vpop.f32.mrb[0].mxu0
  %v199 = vadd.f32 0.0, %v198
  %v200 = vpop.f32.mrb[0].mxu0
  %201 = vmatprep.mubr.f32.mxu0 0.0
  %202 = vmatmul.mubr.f32.gmra.mrb[0].mxu0 %v64
  %v203 = vpop.f32.mrb[0].mxu0
  %v204 = vadd.f32 0.0, %v203
  %v205 = vpop.f32.mrb[0].mxu0
  %206 = vmatprep.mubr.f32.mxu0 0.0
  %207 = vmatmul.mubr.f32.gmra.mrb[0].mxu0 %v67
  %v208 = vpop.f32.mrb[0].mxu0
  %v209 = vadd.f32 0.0, %v208
  %v210 = vpop.f32.mrb[0].mxu0
  %211 = vmatprep.mubr.f32.mxu0 0.0
  %212 = vmatmul.mubr.f32.gmra.mrb[0].mxu0 %v70
  %v213 = vpop.f32.mrb[0].mxu0
  %v214 = vadd.f32 0.0, %v213
  %v215 = vpop.f32.mrb[0].mxu0
  %216 = vmatprep.mubr.f32.mxu0 0.0
  %217 = vmatmul.mubr.f32.gmra.mrb[0].mxu0 %v73
  %v218 = vpop.f32.mrb[0].mxu0
  %v219 = vadd.f32 0.0, %v218
  %v220 = vpop.f32.mrb[0].mxu0
  %221 = vmatprep.mubr.f32.mxu0 0.0
  %222 = vmatmul.mubr.f32.gmra.mrb[0].mxu0 %v76
  %v223 = vpop.f32.mrb[0].mxu0
  %v224 = vadd.f32 0.0, %v223
  %v225 = vpop.f32.mrb[0].mxu0
  %226 = vmatprep.mubr.f32.mxu0 0.0
  %227 = vmatmul.mubr.f32.gmra.mrb[0].mxu0 %v79
  %v228 = vpop.f32.mrb[0].mxu0
  %v229 = vadd.f32 0.0, %v228
  %v230 = vpop.f32.mrb[0].mxu0
  %231 = vmatprep.mubr.f32.mxu0 0.0
  %232 = vmatmul.mubr.f32.gmra.mrb[0].mxu0 %v82
  %v233 = vpop.f32.mrb[0].mxu0
  %v234 = vadd.f32 0.0, %v233
  %v235 = vpop.f32.mrb[0].mxu0
  %236 = vmatprep.mubr.f32.mxu0 0.0
  %237 = vmatmul.mubr.f32.gmra.mrb[0].mxu0 %v85
  %v238 = vpop.f32.mrb[0].mxu0
  %v239 = vadd.f32 0.0, %v238
  %v240 = vpop.f32.mrb[0].mxu0
  %241 = vmatprep.mubr.f32.mxu0 0.0
  %242 = vmatmul.mubr.f32.gmra.mrb[0].mxu0 %v88
  %v243 = vpop.f32.mrb[0].mxu0
  %v244 = vadd.f32 0.0, %v243
  %v245 = vpop.f32.mrb[0].mxu0
  %246 = vmatprep.mubr.f32.mxu0 0.0
  %247 = vmatmul.mubr.f32.gmra.mrb[0].mxu0 %v91
  %v248 = vpop.f32.mrb[0].mxu0
  %v249 = vadd.f32 0.0, %v248
  %v250 = vpop.f32.mrb[0].mxu0
  %251 = vmatprep.mubr.f32.mxu0 0.0
  %252 = vmatmul.mubr.f32.gmra.mrb[0].mxu0 %v94
  %v253 = vpop.f32.mrb[0].mxu0
  %v254 = vadd.f32 0.0, %v253
  %v255 = vpop.f32.mrb[0].mxu0
  %256 = vmatprep.mubr.f32.mxu0 0.0
  %257 = vmatmul.mubr.f32.gmra.mrb[0].mxu0 %v97
  %v258 = vpop.f32.mrb[0].mxu0
  %v259 = vadd.f32 0.0, %v258
  %v260 = vpop.f32.mrb[0].mxu0
  %261 = vmatprep.mubr.f32.mxu0 0.0
  %262 = vmatmul.mubr.f32.gmra.mrb[0].mxu0 %v100
  %v263 = vpop.f32.mrb[0].mxu0
  %v264 = vadd.f32 0.0, %v263
  %v265 = vpop.f32.mrb[0].mxu0
  %266 = vdwg.mxu0
  %v267 = vld [vmem:[%s2] sm:$0xff]
  %v268 = vld [vmem:[%s2 + $0x8] sm:$0xff]
  %v269 = vld [vmem:[%s2 + $0x10] sm:$0xff]
  %v270 = vld [vmem:[%s2 + $0x18] sm:$0xff]
  %v271 = vld [vmem:[%s2 + $0x20] sm:$0xff]
  %v272 = vld [vmem:[%s2 + $0x28] sm:$0xff]
  %v273 = vld [vmem:[%s2 + $0x30] sm:$0xff]
  %v274 = vld [vmem:[%s2 + $0x38] sm:$0xff]
  %v275 = vld [vmem:[%s2 + $0x40] sm:$0xff]
  %v276 = vld [vmem:[%s2 + $0x48] sm:$0xff]
  %v277 = vld [vmem:[%s2 + $0x50] sm:$0xff]
  %v278 = vld [vmem:[%s2 + $0x58] sm:$0xff]
  %v279 = vld [vmem:[%s2 + $0x60] sm:$0xff]
  %v280 = vld [vmem:[%s2 + $0x68] sm:$0xff]
  %v281 = vld [vmem:[%s2 + $0x70] sm:$0xff]
  %v282 = vld [vmem:[%s2 + $0x78] sm:$0xff]
  %v283 = vld [vmem:[%s2 + $0x80] sm:$0xff]
  %v284 = vld [vmem:[%s2 + $0x88] sm:$0xff]
  %v285 = vld [vmem:[%s2 + $0x90] sm:$0xff]
  %v286 = vld [vmem:[%s2 + $0x98] sm:$0xff]
  %v288 = vsel %vm41, %v189, 0
  %v291 = vsel %vm41, %v194, 0
  %v294 = vsel %vm41, %v199, 0
  %v297 = vsel %vm41, %v204, 0
  %299 = vmatprep.subr.mxu0 0.0
  %300 = vmatpush1.msra.mxu0 %v271
  %301 = vmatprep.subr.mxu0 0.0
  %302 = vmatpush1.msra.mxu0 %v272
  %303 = vmatprep.subr.mxu0 0.0
  %304 = vmatpush1.msra.mxu0 %v273
  %305 = vmatprep.subr.mxu0 0.0
  %306 = vmatpush1.msra.mxu0 %v274
  %307 = vmatprep.subr.mxu0 0.0
  %308 = vmatpush1.msra.mxu0 0.0
  %309 = vmatprep.subr.mxu0 0.0
  %310 = vmatpush1.msra.mxu0 0.0
  %311 = vmatprep.subr.mxu0 0.0
  %312 = vmatpush1.msra.mxu0 0.0
  %313 = vmatprep.subr.mxu0 0.0
  %314 = vmatpush1.msra.mxu0 0.0
  %315 = vmatprep.subr.mxu0 0.0
  %316 = vmatpush1.msra.mxu0 0.0
  %317 = vmatprep.subr.mxu0 0.0
  %318 = vmatpush1.msra.mxu0 0.0
  %319 = vmatprep.subr.mxu0 0.0
  %320 = vmatpush1.msra.mxu0 0.0
  %321 = vmatprep.subr.mxu0 0.0
  %322 = vmatpush1.msra.mxu0 0.0
  %323 = vmatprep.subr.mxu0 0.0
  %324 = vmatpush1.msra.mxu0 0.0
  %325 = vmatprep.subr.mxu0 0.0
  %326 = vmatpush1.msra.mxu0 0.0
  %327 = vmatprep.subr.mxu0 0.0
  %328 = vmatpush1.msra.mxu0 0.0
  %329 = vmatprep.subr.mxu0 0.0
  %330 = vmatpush1.msra.mxu0 0.0
  %331 = vmatprep.subr.mxu0 0.0
  %332 = vmatpush1.msra.mxu0 0.0
  %333 = vmatprep.subr.mxu0 0.0
  %334 = vmatpush1.msra.mxu0 0.0
  %335 = vmatprep.subr.mxu0 0.0
  %336 = vmatpush1.msra.mxu0 0.0
  %337 = vmatprep.subr.mxu0 0.0
  %338 = vmatpush1.msra.mxu0 0.0
  %339 = vmatprep.subr.mxu0 0.0
  %340 = vmatpush1.msra.mxu0 0.0
  %341 = vmatprep.subr.mxu0 0.0
  %342 = vmatpush1.msra.mxu0 0.0
  %343 = vmatprep.subr.mxu0 0.0
  %344 = vmatpush1.msra.mxu0 0.0
  %345 = vmatprep.subr.mxu0 0.0
  %346 = vmatpush1.msra.mxu0 0.0
  %347 = vmatprep.subr.mxu0 0.0
  %348 = vmatpush1.msra.mxu0 0.0
  %349 = vmatprep.subr.mxu0 0.0
  %350 = vmatpush1.msra.mxu0 0.0
  %351 = vmatprep.subr.mxu0 0.0
  %352 = vmatpush1.msra.mxu0 0.0
  %353 = vmatprep.subr.mxu0 0.0
  %354 = vmatpush1.msra.mxu0 0.0
  %355 = vmatprep.subr.mxu0 0.0
  %356 = vmatpush1.msra.mxu0 0.0
  %357 = vmatprep.subr.mxu0 0.0
  %358 = vmatpush1.msra.mxu0 0.0
  %359 = vmatprep.subr.mxu0 0.0
  %360 = vmatpush1.msra.mxu0 0.0
  %361 = vmatprep.subr.mxu0 0.0
  %362 = vmatpush1.msra.mxu0 0.0
  %363 = vmatprep.mubr.f32.mxu0 0.0
  %364 = vmatmul.mubr.f32.gmra.mrb[0].mxu0 %v288
  %v365 = vpop.f32.mrb[0].mxu0
  %v366 = vadd.f32 0.0, %v365
  %v367 = vpop.f32.mrb[0].mxu0
  %368 = vmatprep.mubr.f32.mxu0 0.0
  %369 = vmatmul.mubr.f32.gmra.mrb[0].mxu0 %v291
  %v370 = vpop.f32.mrb[0].mxu0
  %v371 = vadd.f32 0.0, %v370
  %v372 = vpop.f32.mrb[0].mxu0
  %373 = vmatprep.mubr.f32.mxu0 0.0
  %374 = vmatmul.mubr.f32.gmra.mrb[0].mxu0 %v294
  %v375 = vpop.f32.mrb[0].mxu0
  %v376 = vadd.f32 0.0, %v375
  %v377 = vpop.f32.mrb[0].mxu0
  %378 = vmatprep.mubr.f32.mxu0 0.0
  %379 = vmatmul.mubr.f32.gmra.mrb[0].mxu0 %v297
  %v380 = vpop.f32.mrb[0].mxu0
  %v381 = vadd.f32 0.0, %v380
  %v382 = vpop.f32.mrb[0].mxu0
  %383 = vdwg.mxu0
  %v385 = vsel %vm41, %v169, 0
  %v388 = vsel %vm41, %v174, 0
  %v391 = vsel %vm41, %v179, 0
  %v394 = vsel %vm41, %v184, 0
  %396 = vmatprep.subr.mxu0 0.0
  %397 = vmatpush1.msra.mxu0 %v267
  %398 = vmatprep.subr.mxu0 0.0
  %399 = vmatpush1.msra.mxu0 %v268
  %400 = vmatprep.subr.mxu0 0.0
  %401 = vmatpush1.msra.mxu0 %v269
  %402 = vmatprep.subr.mxu0 0.0
  %403 = vmatpush1.msra.mxu0 %v270
  %404 = vmatprep.subr.mxu0 0.0
  %405 = vmatpush1.msra.mxu0 0.0
  %406 = vmatprep.subr.mxu0 0.0
  %407 = vmatpush1.msra.mxu0 0.0
  %408 = vmatprep.subr.mxu0 0.0
  %409 = vmatpush1.msra.mxu0 0.0
  %410 = vmatprep.subr.mxu0 0.0
  %411 = vmatpush1.msra.mxu0 0.0
  %412 = vmatprep.subr.mxu0 0.0
  %413 = vmatpush1.msra.mxu0 0.0
  %414 = vmatprep.subr.mxu0 0.0
  %415 = vmatpush1.msra.mxu0 0.0
  %416 = vmatprep.subr.mxu0 0.0
  %417 = vmatpush1.msra.mxu0 0.0
  %418 = vmatprep.subr.mxu0 0.0
  %419 = vmatpush1.msra.mxu0 0.0
  %420 = vmatprep.subr.mxu0 0.0
  %421 = vmatpush1.msra.mxu0 0.0
  %422 = vmatprep.subr.mxu0 0.0
  %423 = vmatpush1.msra.mxu0 0.0
  %424 = vmatprep.subr.mxu0 0.0
  %425 = vmatpush1.msra.mxu0 0.0
  %426 = vmatprep.subr.mxu0 0.0
  %427 = vmatpush1.msra.mxu0 0.0
  %428 = vmatprep.subr.mxu0 0.0
  %429 = vmatpush1.msra.mxu0 0.0
  %430 = vmatprep.subr.mxu0 0.0
  %431 = vmatpush1.msra.mxu0 0.0
  %432 = vmatprep.subr.mxu0 0.0
  %433 = vmatpush1.msra.mxu0 0.0
  %434 = vmatprep.subr.mxu0 0.0
  %435 = vmatpush1.msra.mxu0 0.0
  %436 = vmatprep.subr.mxu0 0.0
  %437 = vmatpush1.msra.mxu0 0.0
  %438 = vmatprep.subr.mxu0 0.0
  %439 = vmatpush1.msra.mxu0 0.0
  %440 = vmatprep.subr.mxu0 0.0
  %441 = vmatpush1.msra.mxu0 0.0
  %442 = vmatprep.subr.mxu0 0.0
  %443 = vmatpush1.msra.mxu0 0.0
  %444 = vmatprep.subr.mxu0 0.0
  %445 = vmatpush1.msra.mxu0 0.0
  %446 = vmatprep.subr.mxu0 0.0
  %447 = vmatpush1.msra.mxu0 0.0
  %448 = vmatprep.subr.mxu0 0.0
  %449 = vmatpush1.msra.mxu0 0.0
  %450 = vmatprep.subr.mxu0 0.0
  %451 = vmatpush1.msra.mxu0 0.0
  %452 = vmatprep.subr.mxu0 0.0
  %453 = vmatpush1.msra.mxu0 0.0
  %454 = vmatprep.subr.mxu0 0.0
  %455 = vmatpush1.msra.mxu0 0.0
  %456 = vmatprep.subr.mxu0 0.0
  %457 = vmatpush1.msra.mxu0 0.0
  %458 = vmatprep.subr.mxu0 0.0
  %459 = vmatpush1.msra.mxu0 0.0
  %460 = vmatprep.mubr.f32.mxu0 0.0
  %461 = vmatmul.mubr.f32.gmra.mrb[0].mxu0 %v385
  %v462 = vpop.f32.mrb[0].mxu0
  %v463 = vadd.f32 %v366, %v462
  %v464 = vpop.f32.mrb[0].mxu0
  %465 = vmatprep.mubr.f32.mxu0 0.0
  %466 = vmatmul.mubr.f32.gmra.mrb[0].mxu0 %v388
  %v467 = vpop.f32.mrb[0].mxu0
  %v468 = vadd.f32 %v371, %v467
  %v469 = vpop.f32.mrb[0].mxu0
  %470 = vmatprep.mubr.f32.mxu0 0.0
  %471 = vmatmul.mubr.f32.gmra.mrb[0].mxu0 %v391
  %v472 = vpop.f32.mrb[0].mxu0
  %v473 = vadd.f32 %v376, %v472
  %v474 = vpop.f32.mrb[0].mxu0
  %475 = vmatprep.mubr.f32.mxu0 0.0
  %476 = vmatmul.mubr.f32.gmra.mrb[0].mxu0 %v394
  %v477 = vpop.f32.mrb[0].mxu0
  %v478 = vadd.f32 %v381, %v477
  %v479 = vpop.f32.mrb[0].mxu0
  %480 = vdwg.mxu0
  %v482 = vsel %vm41, %v209, 0
  %v485 = vsel %vm41, %v214, 0
  %v488 = vsel %vm41, %v219, 0
  %v491 = vsel %vm41, %v224, 0
  %493 = vmatprep.subr.mxu0 0.0
  %494 = vmatpush1.msra.mxu0 %v275
  %495 = vmatprep.subr.mxu0 0.0
  %496 = vmatpush1.msra.mxu0 %v276
  %497 = vmatprep.subr.mxu0 0.0
  %498 = vmatpush1.msra.mxu0 %v277
  %499 = vmatprep.subr.mxu0 0.0
  %500 = vmatpush1.msra.mxu0 %v278
  %501 = vmatprep.subr.mxu0 0.0
  %502 = vmatpush1.msra.mxu0 0.0
  %503 = vmatprep.subr.mxu0 0.0
  %504 = vmatpush1.msra.mxu0 0.0
  %505 = vmatprep.subr.mxu0 0.0
  %506 = vmatpush1.msra.mxu0 0.0
  %507 = vmatprep.subr.mxu0 0.0
  %508 = vmatpush1.msra.mxu0 0.0
  %509 = vmatprep.subr.mxu0 0.0
  %510 = vmatpush1.msra.mxu0 0.0
  %511 = vmatprep.subr.mxu0 0.0
  %512 = vmatpush1.msra.mxu0 0.0
  %513 = vmatprep.subr.mxu0 0.0
  %514 = vmatpush1.msra.mxu0 0.0
  %515 = vmatprep.subr.mxu0 0.0
  %516 = vmatpush1.msra.mxu0 0.0
  %517 = vmatprep.subr.mxu0 0.0
  %518 = vmatpush1.msra.mxu0 0.0
  %519 = vmatprep.subr.mxu0 0.0
  %520 = vmatpush1.msra.mxu0 0.0
  %521 = vmatprep.subr.mxu0 0.0
  %522 = vmatpush1.msra.mxu0 0.0
  %523 = vmatprep.subr.mxu0 0.0
  %524 = vmatpush1.msra.mxu0 0.0
  %525 = vmatprep.subr.mxu0 0.0
  %526 = vmatpush1.msra.mxu0 0.0
  %527 = vmatprep.subr.mxu0 0.0
  %528 = vmatpush1.msra.mxu0 0.0
  %529 = vmatprep.subr.mxu0 0.0
  %530 = vmatpush1.msra.mxu0 0.0
  %531 = vmatprep.subr.mxu0 0.0
  %532 = vmatpush1.msra.mxu0 0.0
  %533 = vmatprep.subr.mxu0 0.0
  %534 = vmatpush1.msra.mxu0 0.0
  %535 = vmatprep.subr.mxu0 0.0
  %536 = vmatpush1.msra.mxu0 0.0
  %537 = vmatprep.subr.mxu0 0.0
  %538 = vmatpush1.msra.mxu0 0.0
  %539 = vmatprep.subr.mxu0 0.0
  %540 = vmatpush1.msra.mxu0 0.0
  %541 = vmatprep.subr.mxu0 0.0
  %542 = vmatpush1.msra.mxu0 0.0
  %543 = vmatprep.subr.mxu0 0.0
  %544 = vmatpush1.msra.mxu0 0.0
  %545 = vmatprep.subr.mxu0 0.0
  %546 = vmatpush1.msra.mxu0 0.0
  %547 = vmatprep.subr.mxu0 0.0
  %548 = vmatpush1.msra.mxu0 0.0
  %549 = vmatprep.subr.mxu0 0.0
  %550 = vmatpush1.msra.mxu0 0.0
  %551 = vmatprep.subr.mxu0 0.0
  %552 = vmatpush1.msra.mxu0 0.0
  %553 = vmatprep.subr.mxu0 0.0
  %554 = vmatpush1.msra.mxu0 0.0
  %555 = vmatprep.subr.mxu0 0.0
  %556 = vmatpush1.msra.mxu0 0.0
  %557 = vmatprep.mubr.f32.mxu0 0.0
  %558 = vmatmul.mubr.f32.gmra.mrb[0].mxu0 %v482
  %v559 = vpop.f32.mrb[0].mxu0
  %v560 = vadd.f32 0.0, %v559
  %v561 = vpop.f32.mrb[0].mxu0
  %562 = vmatprep.mubr.f32.mxu0 0.0
  %563 = vmatmul.mubr.f32.gmra.mrb[0].mxu0 %v485
  %v564 = vpop.f32.mrb[0].mxu0
  %v565 = vadd.f32 0.0, %v564
  %v566 = vpop.f32.mrb[0].mxu0
  %567 = vmatprep.mubr.f32.mxu0 0.0
  %568 = vmatmul.mubr.f32.gmra.mrb[0].mxu0 %v488
  %v569 = vpop.f32.mrb[0].mxu0
  %v570 = vadd.f32 0.0, %v569
  %v571 = vpop.f32.mrb[0].mxu0
  %572 = vmatprep.mubr.f32.mxu0 0.0
  %573 = vmatmul.mubr.f32.gmra.mrb[0].mxu0 %v491
  %v574 = vpop.f32.mrb[0].mxu0
  %v575 = vadd.f32 0.0, %v574
  %v576 = vpop.f32.mrb[0].mxu0
  %577 = vdwg.mxu0
  %v578 = vadd.f32 %v463, %v560
  %v579 = vadd.f32 %v468, %v565
  %v580 = vadd.f32 %v473, %v570
  %v581 = vadd.f32 %v478, %v575
  %v583 = vsel %vm41, %v229, 0
  %v586 = vsel %vm41, %v234, 0
  %v589 = vsel %vm41, %v239, 0
  %v592 = vsel %vm41, %v244, 0
  %594 = vmatprep.subr.mxu0 0.0
  %595 = vmatpush1.msra.mxu0 %v279
  %596 = vmatprep.subr.mxu0 0.0
  %597 = vmatpush1.msra.mxu0 %v280
  %598 = vmatprep.subr.mxu0 0.0
  %599 = vmatpush1.msra.mxu0 %v281
  %600 = vmatprep.subr.mxu0 0.0
  %601 = vmatpush1.msra.mxu0 %v282
  %602 = vmatprep.subr.mxu0 0.0
  %603 = vmatpush1.msra.mxu0 0.0
  %604 = vmatprep.subr.mxu0 0.0
  %605 = vmatpush1.msra.mxu0 0.0
  %606 = vmatprep.subr.mxu0 0.0
  %607 = vmatpush1.msra.mxu0 0.0
  %608 = vmatprep.subr.mxu0 0.0
  %609 = vmatpush1.msra.mxu0 0.0
  %610 = vmatprep.subr.mxu0 0.0
  %611 = vmatpush1.msra.mxu0 0.0
  %612 = vmatprep.subr.mxu0 0.0
  %613 = vmatpush1.msra.mxu0 0.0
  %614 = vmatprep.subr.mxu0 0.0
  %615 = vmatpush1.msra.mxu0 0.0
  %616 = vmatprep.subr.mxu0 0.0
  %617 = vmatpush1.msra.mxu0 0.0
  %618 = vmatprep.subr.mxu0 0.0
  %619 = vmatpush1.msra.mxu0 0.0
  %620 = vmatprep.subr.mxu0 0.0
  %621 = vmatpush1.msra.mxu0 0.0
  %622 = vmatprep.subr.mxu0 0.0
  %623 = vmatpush1.msra.mxu0 0.0
  %624 = vmatprep.subr.mxu0 0.0
  %625 = vmatpush1.msra.mxu0 0.0
  %626 = vmatprep.subr.mxu0 0.0
  %627 = vmatpush1.msra.mxu0 0.0
  %628 = vmatprep.subr.mxu0 0.0
  %629 = vmatpush1.msra.mxu0 0.0
  %630 = vmatprep.subr.mxu0 0.0
  %631 = vmatpush1.msra.mxu0 0.0
  %632 = vmatprep.subr.mxu0 0.0
  %633 = vmatpush1.msra.mxu0 0.0
  %634 = vmatprep.subr.mxu0 0.0
  %635 = vmatpush1.msra.mxu0 0.0
  %636 = vmatprep.subr.mxu0 0.0
  %637 = vmatpush1.msra.mxu0 0.0
  %638 = vmatprep.subr.mxu0 0.0
  %639 = vmatpush1.msra.mxu0 0.0
  %640 = vmatprep.subr.mxu0 0.0
  %641 = vmatpush1.msra.mxu0 0.0
  %642 = vmatprep.subr.mxu0 0.0
  %643 = vmatpush1.msra.mxu0 0.0
  %644 = vmatprep.subr.mxu0 0.0
  %645 = vmatpush1.msra.mxu0 0.0
  %646 = vmatprep.subr.mxu0 0.0
  %647 = vmatpush1.msra.mxu0 0.0
  %648 = vmatprep.subr.mxu0 0.0
  %649 = vmatpush1.msra.mxu0 0.0
  %650 = vmatprep.subr.mxu0 0.0
  %651 = vmatpush1.msra.mxu0 0.0
  %652 = vmatprep.subr.mxu0 0.0
  %653 = vmatpush1.msra.mxu0 0.0
  %654 = vmatprep.subr.mxu0 0.0
  %655 = vmatpush1.msra.mxu0 0.0
  %656 = vmatprep.subr.mxu0 0.0
  %657 = vmatpush1.msra.mxu0 0.0
  %658 = vmatprep.mubr.f32.mxu0 0.0
  %659 = vmatmul.mubr.f32.gmra.mrb[0].mxu0 %v583
  %v660 = vpop.f32.mrb[0].mxu0
  %v661 = vadd.f32 0.0, %v660
  %v662 = vpop.f32.mrb[0].mxu0
  %663 = vmatprep.mubr.f32.mxu0 0.0
  %664 = vmatmul.mubr.f32.gmra.mrb[0].mxu0 %v586
  %v665 = vpop.f32.mrb[0].mxu0
  %v666 = vadd.f32 0.0, %v665
  %v667 = vpop.f32.mrb[0].mxu0
  %668 = vmatprep.mubr.f32.mxu0 0.0
  %669 = vmatmul.mubr.f32.gmra.mrb[0].mxu0 %v589
  %v670 = vpop.f32.mrb[0].mxu0
  %v671 = vadd.f32 0.0, %v670
  %v672 = vpop.f32.mrb[0].mxu0
  %673 = vmatprep.mubr.f32.mxu0 0.0
  %674 = vmatmul.mubr.f32.gmra.mrb[0].mxu0 %v592
  %v675 = vpop.f32.mrb[0].mxu0
  %v676 = vadd.f32 0.0, %v675
  %v677 = vpop.f32.mrb[0].mxu0
  %678 = vdwg.mxu0
  %v679 = vadd.f32 %v578, %v661
  %v680 = vadd.f32 %v579, %v666
  %v681 = vadd.f32 %v580, %v671
  %v682 = vadd.f32 %v581, %v676
  %v684 = vsel %vm41, %v249, 0
  %v687 = vsel %vm41, %v254, 0
  %v690 = vsel %vm41, %v259, 0
  %v693 = vsel %vm41, %v264, 0
  %695 = vmatprep.subr.mxu0 0.0
  %696 = vmatpush1.msra.mxu0 %v283
  %697 = vmatprep.subr.mxu0 0.0
  %698 = vmatpush1.msra.mxu0 %v284
  %699 = vmatprep.subr.mxu0 0.0
  %700 = vmatpush1.msra.mxu0 %v285
  %701 = vmatprep.subr.mxu0 0.0
  %702 = vmatpush1.msra.mxu0 %v286
  %703 = vmatprep.subr.mxu0 0.0
  %704 = vmatpush1.msra.mxu0 0.0
  %705 = vmatprep.subr.mxu0 0.0
  %706 = vmatpush1.msra.mxu0 0.0
  %707 = vmatprep.subr.mxu0 0.0
  %708 = vmatpush1.msra.mxu0 0.0
  %709 = vmatprep.subr.mxu0 0.0
  %710 = vmatpush1.msra.mxu0 0.0
  %711 = vmatprep.subr.mxu0 0.0
  %712 = vmatpush1.msra.mxu0 0.0
  %713 = vmatprep.subr.mxu0 0.0
  %714 = vmatpush1.msra.mxu0 0.0
  %715 = vmatprep.subr.mxu0 0.0
  %716 = vmatpush1.msra.mxu0 0.0
  %717 = vmatprep.subr.mxu0 0.0
  %718 = vmatpush1.msra.mxu0 0.0
  %719 = vmatprep.subr.mxu0 0.0
  %720 = vmatpush1.msra.mxu0 0.0
  %721 = vmatprep.subr.mxu0 0.0
  %722 = vmatpush1.msra.mxu0 0.0
  %723 = vmatprep.subr.mxu0 0.0
  %724 = vmatpush1.msra.mxu0 0.0
  %725 = vmatprep.subr.mxu0 0.0
  %726 = vmatpush1.msra.mxu0 0.0
  %727 = vmatprep.subr.mxu0 0.0
  %728 = vmatpush1.msra.mxu0 0.0
  %729 = vmatprep.subr.mxu0 0.0
  %730 = vmatpush1.msra.mxu0 0.0
  %731 = vmatprep.subr.mxu0 0.0
  %732 = vmatpush1.msra.mxu0 0.0
  %733 = vmatprep.subr.mxu0 0.0
  %734 = vmatpush1.msra.mxu0 0.0
  %735 = vmatprep.subr.mxu0 0.0
  %736 = vmatpush1.msra.mxu0 0.0
  %737 = vmatprep.subr.mxu0 0.0
  %738 = vmatpush1.msra.mxu0 0.0
  %739 = vmatprep.subr.mxu0 0.0
  %740 = vmatpush1.msra.mxu0 0.0
  %741 = vmatprep.subr.mxu0 0.0
  %742 = vmatpush1.msra.mxu0 0.0
  %743 = vmatprep.subr.mxu0 0.0
  %744 = vmatpush1.msra.mxu0 0.0
  %745 = vmatprep.subr.mxu0 0.0
  %746 = vmatpush1.msra.mxu0 0.0
  %747 = vmatprep.subr.mxu0 0.0
  %748 = vmatpush1.msra.mxu0 0.0
  %749 = vmatprep.subr.mxu0 0.0
  %750 = vmatpush1.msra.mxu0 0.0
  %751 = vmatprep.subr.mxu0 0.0
  %752 = vmatpush1.msra.mxu0 0.0
  %753 = vmatprep.subr.mxu0 0.0
  %754 = vmatpush1.msra.mxu0 0.0
  %755 = vmatprep.subr.mxu0 0.0
  %756 = vmatpush1.msra.mxu0 0.0
  %757 = vmatprep.subr.mxu0 0.0
  %758 = vmatpush1.msra.mxu0 0.0
  %759 = vmatprep.mubr.f32.mxu0 0.0
  %760 = vmatmul.mubr.f32.gmra.mrb[0].mxu0 %v684
  %v761 = vpop.f32.mrb[0].mxu0
  %v762 = vadd.f32 0.0, %v761
  %v763 = vpop.f32.mrb[0].mxu0
  %764 = vmatprep.mubr.f32.mxu0 0.0
  %765 = vmatmul.mubr.f32.gmra.mrb[0].mxu0 %v687
  %v766 = vpop.f32.mrb[0].mxu0
  %v767 = vadd.f32 0.0, %v766
  %v768 = vpop.f32.mrb[0].mxu0
  %769 = vmatprep.mubr.f32.mxu0 0.0
  %770 = vmatmul.mubr.f32.gmra.mrb[0].mxu0 %v690
  %v771 = vpop.f32.mrb[0].mxu0
  %v772 = vadd.f32 0.0, %v771
  %v773 = vpop.f32.mrb[0].mxu0
  %774 = vmatprep.mubr.f32.mxu0 0.0
  %775 = vmatmul.mubr.f32.gmra.mrb[0].mxu0 %v693
  %v776 = vpop.f32.mrb[0].mxu0
  %v777 = vadd.f32 0.0, %v776
  %v778 = vpop.f32.mrb[0].mxu0
  %779 = vdwg.mxu0
  %v780 = vadd.f32 %v679, %v762
  %v781 = vadd.f32 %v680, %v767
  %v782 = vadd.f32 %v681, %v772
  %v783 = vadd.f32 %v682, %v777
  %v784 = vld [vmem:[%s3] sm:$0x1]
  %v786 = vlaneseq
  %v787 = vshrl.u32 %v786, 7
  %v788 = vsub.s32 0, %v787
  %v789 = vrot.slane %v784, %v788
  %v791 = vadd.f32 %v780, %v789
  %v792 = vadd.f32 %v781, %v789
  %v793 = vadd.f32 %v782, %v789
  %v794 = vadd.f32 %v783, %v789
  %vm795 = vcmp.ge.f32.partialorder %v791, 0.0
  %vm796 = vcmp.ge.f32.partialorder %v792, 0.0
  %vm797 = vcmp.ge.f32.partialorder %v793, 0.0
  %vm798 = vcmp.ge.f32.partialorder %v794, 0.0
  %v799 = vmul.f32 %v791, 0.1
  %v800 = vmul.f32 %v792, 0.1
  %v801 = vmul.f32 %v793, 0.1
  %v802 = vmul.f32 %v794, 0.1
  %v803 = vsel %vm795, %v791, %v799
  %v804 = vsel %vm796, %v792, %v800
  %v805 = vsel %vm797, %v793, %v801
  %v806 = vsel %vm798, %v794, %v802
  %807 = vmatprep.subr.mxu0 0.0
  %808 = vmatpush1.msra.mxu0 %v803
  %809 = vmatprep.subr.mxu0 0.0
  %810 = vmatpush1.msra.mxu0 %v804
  %811 = vmatprep.subr.mxu0 0.0
  %812 = vmatpush1.msra.mxu0 %v805
  %813 = vmatprep.subr.mxu0 0.0
  %814 = vmatpush1.msra.mxu0 %v806
  %815 = vmatprep.subr.mxu0 0.0
  %816 = vmatpush1.msra.mxu0 0.0
  %817 = vmatprep.subr.mxu0 0.0
  %818 = vmatpush1.msra.mxu0 0.0
  %819 = vmatprep.subr.mxu0 0.0
  %820 = vmatpush1.msra.mxu0 0.0
  %821 = vmatprep.subr.mxu0 0.0
  %822 = vmatpush1.msra.mxu0 0.0
  %823 = vmatprep.subr.mxu0 0.0
  %824 = vmatpush1.msra.mxu0 0.0
  %825 = vmatprep.subr.mxu0 0.0
  %826 = vmatpush1.msra.mxu0 0.0
  %827 = vmatprep.subr.mxu0 0.0
  %828 = vmatpush1.msra.mxu0 0.0
  %829 = vmatprep.subr.mxu0 0.0
  %830 = vmatpush1.msra.mxu0 0.0
  %831 = vmatprep.subr.mxu0 0.0
  %832 = vmatpush1.msra.mxu0 0.0
  %833 = vmatprep.subr.mxu0 0.0
  %834 = vmatpush1.msra.mxu0 0.0
  %835 = vmatprep.subr.mxu0 0.0
  %836 = vmatpush1.msra.mxu0 0.0
  %837 = vmatprep.subr.mxu0 0.0
  %838 = vmatpush1.msra.mxu0 0.0
  %839 = vmatprep.subr.mxu0 0.0
  %840 = vmatpush1.msra.mxu0 0.0
  %841 = vmatprep.subr.mxu0 0.0
  %842 = vmatpush1.msra.mxu0 0.0
  %843 = vmatprep.subr.mxu0 0.0
  %844 = vmatpush1.msra.mxu0 0.0
  %845 = vmatprep.subr.mxu0 0.0
  %846 = vmatpush1.msra.mxu0 0.0
  %847 = vmatprep.subr.mxu0 0.0
  %848 = vmatpush1.msra.mxu0 0.0
  %849 = vmatprep.subr.mxu0 0.0
  %850 = vmatpush1.msra.mxu0 0.0
  %851 = vmatprep.subr.mxu0 0.0
  %852 = vmatpush1.msra.mxu0 0.0
  %853 = vmatprep.subr.mxu0 0.0
  %854 = vmatpush1.msra.mxu0 0.0
  %855 = vmatprep.subr.mxu0 0.0
  %856 = vmatpush1.msra.mxu0 0.0
  %857 = vmatprep.subr.mxu0 0.0
  %858 = vmatpush1.msra.mxu0 0.0
  %859 = vmatprep.subr.mxu0 0.0
  %860 = vmatpush1.msra.mxu0 0.0
  %861 = vmatprep.subr.mxu0 0.0
  %862 = vmatpush1.msra.mxu0 0.0
  %863 = vmatprep.subr.mxu0 0.0
  %864 = vmatpush1.msra.mxu0 0.0
  %865 = vmatprep.subr.mxu0 0.0
  %866 = vmatpush1.msra.mxu0 0.0
  %867 = vmatprep.subr.mxu0 0.0
  %868 = vmatpush1.msra.mxu0 0.0
  %869 = vmatprep.subr.mxu0 0.0
  %870 = vmatpush1.msra.mxu0 0.0
  %871 = vmatprep.mubr.f32.mxu0 0.0
  %872 = vmatmul.mubr.f32.gmra.mrb[0].mxu0 %v43
  %v873 = vpop.f32.mrb[0].mxu0
  %v874 = vadd.f32 0.0, %v873
  %v875 = vpop.f32.mrb[0].mxu0
  %876 = vmatprep.mubr.f32.mxu0 0.0
  %877 = vmatmul.mubr.f32.gmra.mrb[0].mxu0 %v46
  %v878 = vpop.f32.mrb[0].mxu0
  %v879 = vadd.f32 0.0, %v878
  %v880 = vpop.f32.mrb[0].mxu0
  %881 = vmatprep.mubr.f32.mxu0 0.0
  %882 = vmatmul.mubr.f32.gmra.mrb[0].mxu0 %v49
  %v883 = vpop.f32.mrb[0].mxu0
  %v884 = vadd.f32 0.0, %v883
  %v885 = vpop.f32.mrb[0].mxu0
  %886 = vmatprep.mubr.f32.mxu0 0.0
  %887 = vmatmul.mubr.f32.gmra.mrb[0].mxu0 %v52
  %v888 = vpop.f32.mrb[0].mxu0
  %v889 = vadd.f32 0.0, %v888
  %v890 = vpop.f32.mrb[0].mxu0
  %891 = vmatprep.mubr.f32.mxu0 0.0
  %892 = vmatmul.mubr.f32.gmra.mrb[0].mxu0 %v55
  %v893 = vpop.f32.mrb[0].mxu0
  %v894 = vadd.f32 0.0, %v893
  %v895 = vpop.f32.mrb[0].mxu0
  %896 = vmatprep.mubr.f32.mxu0 0.0
  %897 = vmatmul.mubr.f32.gmra.mrb[0].mxu0 %v58
  %v898 = vpop.f32.mrb[0].mxu0
  %v899 = vadd.f32 0.0, %v898
  %v900 = vpop.f32.mrb[0].mxu0
  %901 = vmatprep.mubr.f32.mxu0 0.0
  %902 = vmatmul.mubr.f32.gmra.mrb[0].mxu0 %v61
  %v903 = vpop.f32.mrb[0].mxu0
  %v904 = vadd.f32 0.0, %v903
  %v905 = vpop.f32.mrb[0].mxu0
  %906 = vmatprep.mubr.f32.mxu0 0.0
  %907 = vmatmul.mubr.f32.gmra.mrb[0].mxu0 %v64
  %v908 = vpop.f32.mrb[0].mxu0
  %v909 = vadd.f32 0.0, %v908
  %v910 = vpop.f32.mrb[0].mxu0
  %911 = vmatprep.mubr.f32.mxu0 0.0
  %912 = vmatmul.mubr.f32.gmra.mrb[0].mxu0 %v67
  %v913 = vpop.f32.mrb[0].mxu0
  %v914 = vadd.f32 0.0, %v913
  %v915 = vpop.f32.mrb[0].mxu0
  %916 = vmatprep.mubr.f32.mxu0 0.0
  %917 = vmatmul.mubr.f32.gmra.mrb[0].mxu0 %v70
  %v918 = vpop.f32.mrb[0].mxu0
  %v919 = vadd.f32 0.0, %v918
  %v920 = vpop.f32.mrb[0].mxu0
  %921 = vmatprep.mubr.f32.mxu0 0.0
  %922 = vmatmul.mubr.f32.gmra.mrb[0].mxu0 %v73
  %v923 = vpop.f32.mrb[0].mxu0
  %v924 = vadd.f32 0.0, %v923
  %v925 = vpop.f32.mrb[0].mxu0
  %926 = vmatprep.mubr.f32.mxu0 0.0
  %927 = vmatmul.mubr.f32.gmra.mrb[0].mxu0 %v76
  %v928 = vpop.f32.mrb[0].mxu0
  %v929 = vadd.f32 0.0, %v928
  %v930 = vpop.f32.mrb[0].mxu0
  %931 = vmatprep.mubr.f32.mxu0 0.0
  %932 = vmatmul.mubr.f32.gmra.mrb[0].mxu0 %v79
  %v933 = vpop.f32.mrb[0].mxu0
  %v934 = vadd.f32 0.0, %v933
  %v935 = vpop.f32.mrb[0].mxu0
  %936 = vmatprep.mubr.f32.mxu0 0.0
  %937 = vmatmul.mubr.f32.gmra.mrb[0].mxu0 %v82
  %v938 = vpop.f32.mrb[0].mxu0
  %v939 = vadd.f32 0.0, %v938
  %v940 = vpop.f32.mrb[0].mxu0
  %941 = vmatprep.mubr.f32.mxu0 0.0
  %942 = vmatmul.mubr.f32.gmra.mrb[0].mxu0 %v85
  %v943 = vpop.f32.mrb[0].mxu0
  %v944 = vadd.f32 0.0, %v943
  %v945 = vpop.f32.mrb[0].mxu0
  %946 = vmatprep.mubr.f32.mxu0 0.0
  %947 = vmatmul.mubr.f32.gmra.mrb[0].mxu0 %v88
  %v948 = vpop.f32.mrb[0].mxu0
  %v949 = vadd.f32 0.0, %v948
  %v950 = vpop.f32.mrb[0].mxu0
  %951 = vmatprep.mubr.f32.mxu0 0.0
  %952 = vmatmul.mubr.f32.gmra.mrb[0].mxu0 %v91
  %v953 = vpop.f32.mrb[0].mxu0
  %v954 = vadd.f32 0.0, %v953
  %v955 = vpop.f32.mrb[0].mxu0
  %956 = vmatprep.mubr.f32.mxu0 0.0
  %957 = vmatmul.mubr.f32.gmra.mrb[0].mxu0 %v94
  %v958 = vpop.f32.mrb[0].mxu0
  %v959 = vadd.f32 0.0, %v958
  %v960 = vpop.f32.mrb[0].mxu0
  %961 = vmatprep.mubr.f32.mxu0 0.0
  %962 = vmatmul.mubr.f32.gmra.mrb[0].mxu0 %v97
  %v963 = vpop.f32.mrb[0].mxu0
  %v964 = vadd.f32 0.0, %v963
  %v965 = vpop.f32.mrb[0].mxu0
  %966 = vmatprep.mubr.f32.mxu0 0.0
  %967 = vmatmul.mubr.f32.gmra.mrb[0].mxu0 %v100
  %v968 = vpop.f32.mrb[0].mxu0
  %v969 = vadd.f32 0.0, %v968
  %v970 = vpop.f32.mrb[0].mxu0
  %971 = vdwg.mxu0
  %s972 = scalar_lea.vmem %s2, 160
  %v973 = vld [vmem:[%s972] sm:$0xff]
  %v974 = vld [vmem:[%s972 + $0x8] sm:$0xff]
  %v975 = vld [vmem:[%s972 + $0x10] sm:$0xff]
  %v976 = vld [vmem:[%s972 + $0x18] sm:$0xff]
  %v977 = vld [vmem:[%s972 + $0x20] sm:$0xff]
  %v978 = vld [vmem:[%s972 + $0x28] sm:$0xff]
  %v979 = vld [vmem:[%s972 + $0x30] sm:$0xff]
  %v980 = vld [vmem:[%s972 + $0x38] sm:$0xff]
  %v981 = vld [vmem:[%s972 + $0x40] sm:$0xff]
  %v982 = vld [vmem:[%s972 + $0x48] sm:$0xff]
  %v983 = vld [vmem:[%s972 + $0x50] sm:$0xff]
  %v984 = vld [vmem:[%s972 + $0x58] sm:$0xff]
  %v985 = vld [vmem:[%s972 + $0x60] sm:$0xff]
  %v986 = vld [vmem:[%s972 + $0x68] sm:$0xff]
  %v987 = vld [vmem:[%s972 + $0x70] sm:$0xff]
  %v988 = vld [vmem:[%s972 + $0x78] sm:$0xff]
  %v989 = vld [vmem:[%s972 + $0x80] sm:$0xff]
  %v990 = vld [vmem:[%s972 + $0x88] sm:$0xff]
  %v991 = vld [vmem:[%s972 + $0x90] sm:$0xff]
  %v992 = vld [vmem:[%s972 + $0x98] sm:$0xff]
  %v994 = vsel %vm41, %v894, 0
  %v997 = vsel %vm41, %v899, 0
  %v1000 = vsel %vm41, %v904, 0
  %v1003 = vsel %vm41, %v909, 0
  %1005 = vmatprep.subr.mxu0 0.0
  %1006 = vmatpush1.msra.mxu0 %v977
  %1007 = vmatprep.subr.mxu0 0.0
  %1008 = vmatpush1.msra.mxu0 %v978
  %1009 = vmatprep.subr.mxu0 0.0
  %1010 = vmatpush1.msra.mxu0 %v979
  %1011 = vmatprep.subr.mxu0 0.0
  %1012 = vmatpush1.msra.mxu0 %v980
  %1013 = vmatprep.subr.mxu0 0.0
  %1014 = vmatpush1.msra.mxu0 0.0
  %1015 = vmatprep.subr.mxu0 0.0
  %1016 = vmatpush1.msra.mxu0 0.0
  %1017 = vmatprep.subr.mxu0 0.0
  %1018 = vmatpush1.msra.mxu0 0.0
  %1019 = vmatprep.subr.mxu0 0.0
  %1020 = vmatpush1.msra.mxu0 0.0
  %1021 = vmatprep.subr.mxu0 0.0
  %1022 = vmatpush1.msra.mxu0 0.0
  %1023 = vmatprep.subr.mxu0 0.0
  %1024 = vmatpush1.msra.mxu0 0.0
  %1025 = vmatprep.subr.mxu0 0.0
  %1026 = vmatpush1.msra.mxu0 0.0
  %1027 = vmatprep.subr.mxu0 0.0
  %1028 = vmatpush1.msra.mxu0 0.0
  %1029 = vmatprep.subr.mxu0 0.0
  %1030 = vmatpush1.msra.mxu0 0.0
  %1031 = vmatprep.subr.mxu0 0.0
  %1032 = vmatpush1.msra.mxu0 0.0
  %1033 = vmatprep.subr.mxu0 0.0
  %1034 = vmatpush1.msra.mxu0 0.0
  %1035 = vmatprep.subr.mxu0 0.0
  %1036 = vmatpush1.msra.mxu0 0.0
  %1037 = vmatprep.subr.mxu0 0.0
  %1038 = vmatpush1.msra.mxu0 0.0
  %1039 = vmatprep.subr.mxu0 0.0
  %1040 = vmatpush1.msra.mxu0 0.0
  %1041 = vmatprep.subr.mxu0 0.0
  %1042 = vmatpush1.msra.mxu0 0.0
  %1043 = vmatprep.subr.mxu0 0.0
  %1044 = vmatpush1.msra.mxu0 0.0
  %1045 = vmatprep.subr.mxu0 0.0
  %1046 = vmatpush1.msra.mxu0 0.0
  %1047 = vmatprep.subr.mxu0 0.0
  %1048 = vmatpush1.msra.mxu0 0.0
  %1049 = vmatprep.subr.mxu0 0.0
  %1050 = vmatpush1.msra.mxu0 0.0
  %1051 = vmatprep.subr.mxu0 0.0
  %1052 = vmatpush1.msra.mxu0 0.0
  %1053 = vmatprep.subr.mxu0 0.0
  %1054 = vmatpush1.msra.mxu0 0.0
  %1055 = vmatprep.subr.mxu0 0.0
  %1056 = vmatpush1.msra.mxu0 0.0
  %1057 = vmatprep.subr.mxu0 0.0
  %1058 = vmatpush1.msra.mxu0 0.0
  %1059 = vmatprep.subr.mxu0 0.0
  %1060 = vmatpush1.msra.mxu0 0.0
  %1061 = vmatprep.subr.mxu0 0.0
  %1062 = vmatpush1.msra.mxu0 0.0
  %1063 = vmatprep.subr.mxu0 0.0
  %1064 = vmatpush1.msra.mxu0 0.0
  %1065 = vmatprep.subr.mxu0 0.0
  %1066 = vmatpush1.msra.mxu0 0.0
  %1067 = vmatprep.subr.mxu0 0.0
  %1068 = vmatpush1.msra.mxu0 0.0
  %1069 = vmatprep.mubr.f32.mxu0 0.0
  %1070 = vmatmul.mubr.f32.gmra.mrb[0].mxu0 %v994
  %v1071 = vpop.f32.mrb[0].mxu0
  %v1072 = vadd.f32 0.0, %v1071
  %v1073 = vpop.f32.mrb[0].mxu0
  %1074 = vmatprep.mubr.f32.mxu0 0.0
  %1075 = vmatmul.mubr.f32.gmra.mrb[0].mxu0 %v997
  %v1076 = vpop.f32.mrb[0].mxu0
  %v1077 = vadd.f32 0.0, %v1076
  %v1078 = vpop.f32.mrb[0].mxu0
  %1079 = vmatprep.mubr.f32.mxu0 0.0
  %1080 = vmatmul.mubr.f32.gmra.mrb[0].mxu0 %v1000
  %v1081 = vpop.f32.mrb[0].mxu0
  %v1082 = vadd.f32 0.0, %v1081
  %v1083 = vpop.f32.mrb[0].mxu0
  %1084 = vmatprep.mubr.f32.mxu0 0.0
  %1085 = vmatmul.mubr.f32.gmra.mrb[0].mxu0 %v1003
  %v1086 = vpop.f32.mrb[0].mxu0
  %v1087 = vadd.f32 0.0, %v1086
  %v1088 = vpop.f32.mrb[0].mxu0
  %1089 = vdwg.mxu0
  %v1091 = vsel %vm41, %v874, 0
  %v1094 = vsel %vm41, %v879, 0
  %v1097 = vsel %vm41, %v884, 0
  %v1100 = vsel %vm41, %v889, 0
  %1102 = vmatprep.subr.mxu0 0.0
  %1103 = vmatpush1.msra.mxu0 %v973
  %1104 = vmatprep.subr.mxu0 0.0
  %1105 = vmatpush1.msra.mxu0 %v974
  %1106 = vmatprep.subr.mxu0 0.0
  %1107 = vmatpush1.msra.mxu0 %v975
  %1108 = vmatprep.subr.mxu0 0.0
  %1109 = vmatpush1.msra.mxu0 %v976
  %1110 = vmatprep.subr.mxu0 0.0
  %1111 = vmatpush1.msra.mxu0 0.0
  %1112 = vmatprep.subr.mxu0 0.0
  %1113 = vmatpush1.msra.mxu0 0.0
  %1114 = vmatprep.subr.mxu0 0.0
  %1115 = vmatpush1.msra.mxu0 0.0
  %1116 = vmatprep.subr.mxu0 0.0
  %1117 = vmatpush1.msra.mxu0 0.0
  %1118 = vmatprep.subr.mxu0 0.0
  %1119 = vmatpush1.msra.mxu0 0.0
  %1120 = vmatprep.subr.mxu0 0.0
  %1121 = vmatpush1.msra.mxu0 0.0
  %1122 = vmatprep.subr.mxu0 0.0
  %1123 = vmatpush1.msra.mxu0 0.0
  %1124 = vmatprep.subr.mxu0 0.0
  %1125 = vmatpush1.msra.mxu0 0.0
  %1126 = vmatprep.subr.mxu0 0.0
  %1127 = vmatpush1.msra.mxu0 0.0
  %1128 = vmatprep.subr.mxu0 0.0
  %1129 = vmatpush1.msra.mxu0 0.0
  %1130 = vmatprep.subr.mxu0 0.0
  %1131 = vmatpush1.msra.mxu0 0.0
  %1132 = vmatprep.subr.mxu0 0.0
  %1133 = vmatpush1.msra.mxu0 0.0
  %1134 = vmatprep.subr.mxu0 0.0
  %1135 = vmatpush1.msra.mxu0 0.0
  %1136 = vmatprep.subr.mxu0 0.0
  %1137 = vmatpush1.msra.mxu0 0.0
  %1138 = vmatprep.subr.mxu0 0.0
  %1139 = vmatpush1.msra.mxu0 0.0
  %1140 = vmatprep.subr.mxu0 0.0
  %1141 = vmatpush1.msra.mxu0 0.0
  %1142 = vmatprep.subr.mxu0 0.0
  %1143 = vmatpush1.msra.mxu0 0.0
  %1144 = vmatprep.subr.mxu0 0.0
  %1145 = vmatpush1.msra.mxu0 0.0
  %1146 = vmatprep.subr.mxu0 0.0
  %1147 = vmatpush1.msra.mxu0 0.0
  %1148 = vmatprep.subr.mxu0 0.0
  %1149 = vmatpush1.msra.mxu0 0.0
  %1150 = vmatprep.subr.mxu0 0.0
  %1151 = vmatpush1.msra.mxu0 0.0
  %1152 = vmatprep.subr.mxu0 0.0
  %1153 = vmatpush1.msra.mxu0 0.0
  %1154 = vmatprep.subr.mxu0 0.0
  %1155 = vmatpush1.msra.mxu0 0.0
  %1156 = vmatprep.subr.mxu0 0.0
  %1157 = vmatpush1.msra.mxu0 0.0
  %1158 = vmatprep.subr.mxu0 0.0
  %1159 = vmatpush1.msra.mxu0 0.0
  %1160 = vmatprep.subr.mxu0 0.0
  %1161 = vmatpush1.msra.mxu0 0.0
  %1162 = vmatprep.subr.mxu0 0.0
  %1163 = vmatpush1.msra.mxu0 0.0
  %1164 = vmatprep.subr.mxu0 0.0
  %1165 = vmatpush1.msra.mxu0 0.0
  %1166 = vmatprep.mubr.f32.mxu0 0.0
  %1167 = vmatmul.mubr.f32.gmra.mrb[0].mxu0 %v1091
  %v1168 = vpop.f32.mrb[0].mxu0
  %v1169 = vadd.f32 %v1072, %v1168
  %v1170 = vpop.f32.mrb[0].mxu0
  %1171 = vmatprep.mubr.f32.mxu0 0.0
  %1172 = vmatmul.mubr.f32.gmra.mrb[0].mxu0 %v1094
  %v1173 = vpop.f32.mrb[0].mxu0
  %v1174 = vadd.f32 %v1077, %v1173
  %v1175 = vpop.f32.mrb[0].mxu0
  %1176 = vmatprep.mubr.f32.mxu0 0.0
  %1177 = vmatmul.mubr.f32.gmra.mrb[0].mxu0 %v1097
  %v1178 = vpop.f32.mrb[0].mxu0
  %v1179 = vadd.f32 %v1082, %v1178
  %v1180 = vpop.f32.mrb[0].mxu0
  %1181 = vmatprep.mubr.f32.mxu0 0.0
  %1182 = vmatmul.mubr.f32.gmra.mrb[0].mxu0 %v1100
  %v1183 = vpop.f32.mrb[0].mxu0
  %v1184 = vadd.f32 %v1087, %v1183
  %v1185 = vpop.f32.mrb[0].mxu0
  %1186 = vdwg.mxu0
  %v1188 = vsel %vm41, %v914, 0
  %v1191 = vsel %vm41, %v919, 0
  %v1194 = vsel %vm41, %v924, 0
  %v1197 = vsel %vm41, %v929, 0
  %1199 = vmatprep.subr.mxu0 0.0
  %1200 = vmatpush1.msra.mxu0 %v981
  %1201 = vmatprep.subr.mxu0 0.0
  %1202 = vmatpush1.msra.mxu0 %v982
  %1203 = vmatprep.subr.mxu0 0.0
  %1204 = vmatpush1.msra.mxu0 %v983
  %1205 = vmatprep.subr.mxu0 0.0
  %1206 = vmatpush1.msra.mxu0 %v984
  %1207 = vmatprep.subr.mxu0 0.0
  %1208 = vmatpush1.msra.mxu0 0.0
  %1209 = vmatprep.subr.mxu0 0.0
  %1210 = vmatpush1.msra.mxu0 0.0
  %1211 = vmatprep.subr.mxu0 0.0
  %1212 = vmatpush1.msra.mxu0 0.0
  %1213 = vmatprep.subr.mxu0 0.0
  %1214 = vmatpush1.msra.mxu0 0.0
  %1215 = vmatprep.subr.mxu0 0.0
  %1216 = vmatpush1.msra.mxu0 0.0
  %1217 = vmatprep.subr.mxu0 0.0
  %1218 = vmatpush1.msra.mxu0 0.0
  %1219 = vmatprep.subr.mxu0 0.0
  %1220 = vmatpush1.msra.mxu0 0.0
  %1221 = vmatprep.subr.mxu0 0.0
  %1222 = vmatpush1.msra.mxu0 0.0
  %1223 = vmatprep.subr.mxu0 0.0
  %1224 = vmatpush1.msra.mxu0 0.0
  %1225 = vmatprep.subr.mxu0 0.0
  %1226 = vmatpush1.msra.mxu0 0.0
  %1227 = vmatprep.subr.mxu0 0.0
  %1228 = vmatpush1.msra.mxu0 0.0
  %1229 = vmatprep.subr.mxu0 0.0
  %1230 = vmatpush1.msra.mxu0 0.0
  %1231 = vmatprep.subr.mxu0 0.0
  %1232 = vmatpush1.msra.mxu0 0.0
  %1233 = vmatprep.subr.mxu0 0.0
  %1234 = vmatpush1.msra.mxu0 0.0
  %1235 = vmatprep.subr.mxu0 0.0
  %1236 = vmatpush1.msra.mxu0 0.0
  %1237 = vmatprep.subr.mxu0 0.0
  %1238 = vmatpush1.msra.mxu0 0.0
  %1239 = vmatprep.subr.mxu0 0.0
  %1240 = vmatpush1.msra.mxu0 0.0
  %1241 = vmatprep.subr.mxu0 0.0
  %1242 = vmatpush1.msra.mxu0 0.0
  %1243 = vmatprep.subr.mxu0 0.0
  %1244 = vmatpush1.msra.mxu0 0.0
  %1245 = vmatprep.subr.mxu0 0.0
  %1246 = vmatpush1.msra.mxu0 0.0
  %1247 = vmatprep.subr.mxu0 0.0
  %1248 = vmatpush1.msra.mxu0 0.0
  %1249 = vmatprep.subr.mxu0 0.0
  %1250 = vmatpush1.msra.mxu0 0.0
  %1251 = vmatprep.subr.mxu0 0.0
  %1252 = vmatpush1.msra.mxu0 0.0
  %1253 = vmatprep.subr.mxu0 0.0
  %1254 = vmatpush1.msra.mxu0 0.0
  %1255 = vmatprep.subr.mxu0 0.0
  %1256 = vmatpush1.msra.mxu0 0.0
  %1257 = vmatprep.subr.mxu0 0.0
  %1258 = vmatpush1.msra.mxu0 0.0
  %1259 = vmatprep.subr.mxu0 0.0
  %1260 = vmatpush1.msra.mxu0 0.0
  %1261 = vmatprep.subr.mxu0 0.0
  %1262 = vmatpush1.msra.mxu0 0.0
  %1263 = vmatprep.mubr.f32.mxu0 0.0
  %1264 = vmatmul.mubr.f32.gmra.mrb[0].mxu0 %v1188
  %v1265 = vpop.f32.mrb[0].mxu0
  %v1266 = vadd.f32 0.0, %v1265
  %v1267 = vpop.f32.mrb[0].mxu0
  %1268 = vmatprep.mubr.f32.mxu0 0.0
  %1269 = vmatmul.mubr.f32.gmra.mrb[0].mxu0 %v1191
  %v1270 = vpop.f32.mrb[0].mxu0
  %v1271 = vadd.f32 0.0, %v1270
  %v1272 = vpop.f32.mrb[0].mxu0
  %1273 = vmatprep.mubr.f32.mxu0 0.0
  %1274 = vmatmul.mubr.f32.gmra.mrb[0].mxu0 %v1194
  %v1275 = vpop.f32.mrb[0].mxu0
  %v1276 = vadd.f32 0.0, %v1275
  %v1277 = vpop.f32.mrb[0].mxu0
  %1278 = vmatprep.mubr.f32.mxu0 0.0
  %1279 = vmatmul.mubr.f32.gmra.mrb[0].mxu0 %v1197
  %v1280 = vpop.f32.mrb[0].mxu0
  %v1281 = vadd.f32 0.0, %v1280
  %v1282 = vpop.f32.mrb[0].mxu0
  %1283 = vdwg.mxu0
  %v1284 = vadd.f32 %v1169, %v1266
  %v1285 = vadd.f32 %v1174, %v1271
  %v1286 = vadd.f32 %v1179, %v1276
  %v1287 = vadd.f32 %v1184, %v1281
  %v1289 = vsel %vm41, %v934, 0
  %v1292 = vsel %vm41, %v939, 0
  %v1295 = vsel %vm41, %v944, 0
  %v1298 = vsel %vm41, %v949, 0
  %1300 = vmatprep.subr.mxu0 0.0
  %1301 = vmatpush1.msra.mxu0 %v985
  %1302 = vmatprep.subr.mxu0 0.0
  %1303 = vmatpush1.msra.mxu0 %v986
  %1304 = vmatprep.subr.mxu0 0.0
  %1305 = vmatpush1.msra.mxu0 %v987
  %1306 = vmatprep.subr.mxu0 0.0
  %1307 = vmatpush1.msra.mxu0 %v988
  %1308 = vmatprep.subr.mxu0 0.0
  %1309 = vmatpush1.msra.mxu0 0.0
  %1310 = vmatprep.subr.mxu0 0.0
  %1311 = vmatpush1.msra.mxu0 0.0
  %1312 = vmatprep.subr.mxu0 0.0
  %1313 = vmatpush1.msra.mxu0 0.0
  %1314 = vmatprep.subr.mxu0 0.0
  %1315 = vmatpush1.msra.mxu0 0.0
  %1316 = vmatprep.subr.mxu0 0.0
  %1317 = vmatpush1.msra.mxu0 0.0
  %1318 = vmatprep.subr.mxu0 0.0
  %1319 = vmatpush1.msra.mxu0 0.0
  %1320 = vmatprep.subr.mxu0 0.0
  %1321 = vmatpush1.msra.mxu0 0.0
  %1322 = vmatprep.subr.mxu0 0.0
  %1323 = vmatpush1.msra.mxu0 0.0
  %1324 = vmatprep.subr.mxu0 0.0
  %1325 = vmatpush1.msra.mxu0 0.0
  %1326 = vmatprep.subr.mxu0 0.0
  %1327 = vmatpush1.msra.mxu0 0.0
  %1328 = vmatprep.subr.mxu0 0.0
  %1329 = vmatpush1.msra.mxu0 0.0
  %1330 = vmatprep.subr.mxu0 0.0
  %1331 = vmatpush1.msra.mxu0 0.0
  %1332 = vmatprep.subr.mxu0 0.0
  %1333 = vmatpush1.msra.mxu0 0.0
  %1334 = vmatprep.subr.mxu0 0.0
  %1335 = vmatpush1.msra.mxu0 0.0
  %1336 = vmatprep.subr.mxu0 0.0
  %1337 = vmatpush1.msra.mxu0 0.0
  %1338 = vmatprep.subr.mxu0 0.0
  %1339 = vmatpush1.msra.mxu0 0.0
  %1340 = vmatprep.subr.mxu0 0.0
  %1341 = vmatpush1.msra.mxu0 0.0
  %1342 = vmatprep.subr.mxu0 0.0
  %1343 = vmatpush1.msra.mxu0 0.0
  %1344 = vmatprep.subr.mxu0 0.0
  %1345 = vmatpush1.msra.mxu0 0.0
  %1346 = vmatprep.subr.mxu0 0.0
  %1347 = vmatpush1.msra.mxu0 0.0
  %1348 = vmatprep.subr.mxu0 0.0
  %1349 = vmatpush1.msra.mxu0 0.0
  %1350 = vmatprep.subr.mxu0 0.0
  %1351 = vmatpush1.msra.mxu0 0.0
  %1352 = vmatprep.subr.mxu0 0.0
  %1353 = vmatpush1.msra.mxu0 0.0
  %1354 = vmatprep.subr.mxu0 0.0
  %1355 = vmatpush1.msra.mxu0 0.0
  %1356 = vmatprep.subr.mxu0 0.0
  %1357 = vmatpush1.msra.mxu0 0.0
  %1358 = vmatprep.subr.mxu0 0.0
  %1359 = vmatpush1.msra.mxu0 0.0
  %1360 = vmatprep.subr.mxu0 0.0
  %1361 = vmatpush1.msra.mxu0 0.0
  %1362 = vmatprep.subr.mxu0 0.0
  %1363 = vmatpush1.msra.mxu0 0.0
  %1364 = vmatprep.mubr.f32.mxu0 0.0
  %1365 = vmatmul.mubr.f32.gmra.mrb[0].mxu0 %v1289
  %v1366 = vpop.f32.mrb[0].mxu0
  %v1367 = vadd.f32 0.0, %v1366
  %v1368 = vpop.f32.mrb[0].mxu0
  %1369 = vmatprep.mubr.f32.mxu0 0.0
  %1370 = vmatmul.mubr.f32.gmra.mrb[0].mxu0 %v1292
  %v1371 = vpop.f32.mrb[0].mxu0
  %v1372 = vadd.f32 0.0, %v1371
  %v1373 = vpop.f32.mrb[0].mxu0
  %1374 = vmatprep.mubr.f32.mxu0 0.0
  %1375 = vmatmul.mubr.f32.gmra.mrb[0].mxu0 %v1295
  %v1376 = vpop.f32.mrb[0].mxu0
  %v1377 = vadd.f32 0.0, %v1376
  %v1378 = vpop.f32.mrb[0].mxu0
  %1379 = vmatprep.mubr.f32.mxu0 0.0
  %1380 = vmatmul.mubr.f32.gmra.mrb[0].mxu0 %v1298
  %v1381 = vpop.f32.mrb[0].mxu0
  %v1382 = vadd.f32 0.0, %v1381
  %v1383 = vpop.f32.mrb[0].mxu0
  %1384 = vdwg.mxu0
  %v1385 = vadd.f32 %v1284, %v1367
  %v1386 = vadd.f32 %v1285, %v1372
  %v1387 = vadd.f32 %v1286, %v1377
  %v1388 = vadd.f32 %v1287, %v1382
  %v1390 = vsel %vm41, %v954, 0
  %v1393 = vsel %vm41, %v959, 0
  %v1396 = vsel %vm41, %v964, 0
  %v1399 = vsel %vm41, %v969, 0
  %1401 = vmatprep.subr.mxu0 0.0
  %1402 = vmatpush1.msra.mxu0 %v989
  %1403 = vmatprep.subr.mxu0 0.0
  %1404 = vmatpush1.msra.mxu0 %v990
  %1405 = vmatprep.subr.mxu0 0.0
  %1406 = vmatpush1.msra.mxu0 %v991
  %1407 = vmatprep.subr.mxu0 0.0
  %1408 = vmatpush1.msra.mxu0 %v992
  %1409 = vmatprep.subr.mxu0 0.0
  %1410 = vmatpush1.msra.mxu0 0.0
  %1411 = vmatprep.subr.mxu0 0.0
  %1412 = vmatpush1.msra.mxu0 0.0
  %1413 = vmatprep.subr.mxu0 0.0
  %1414 = vmatpush1.msra.mxu0 0.0
  %1415 = vmatprep.subr.mxu0 0.0
  %1416 = vmatpush1.msra.mxu0 0.0
  %1417 = vmatprep.subr.mxu0 0.0
  %1418 = vmatpush1.msra.mxu0 0.0
  %1419 = vmatprep.subr.mxu0 0.0
  %1420 = vmatpush1.msra.mxu0 0.0
  %1421 = vmatprep.subr.mxu0 0.0
  %1422 = vmatpush1.msra.mxu0 0.0
  %1423 = vmatprep.subr.mxu0 0.0
  %1424 = vmatpush1.msra.mxu0 0.0
  %1425 = vmatprep.subr.mxu0 0.0
  %1426 = vmatpush1.msra.mxu0 0.0
  %1427 = vmatprep.subr.mxu0 0.0
  %1428 = vmatpush1.msra.mxu0 0.0
  %1429 = vmatprep.subr.mxu0 0.0
  %1430 = vmatpush1.msra.mxu0 0.0
  %1431 = vmatprep.subr.mxu0 0.0
  %1432 = vmatpush1.msra.mxu0 0.0
  %1433 = vmatprep.subr.mxu0 0.0
  %1434 = vmatpush1.msra.mxu0 0.0
  %1435 = vmatprep.subr.mxu0 0.0
  %1436 = vmatpush1.msra.mxu0 0.0
  %1437 = vmatprep.subr.mxu0 0.0
  %1438 = vmatpush1.msra.mxu0 0.0
  %1439 = vmatprep.subr.mxu0 0.0
  %1440 = vmatpush1.msra.mxu0 0.0
  %1441 = vmatprep.subr.mxu0 0.0
  %1442 = vmatpush1.msra.mxu0 0.0
  %1443 = vmatprep.subr.mxu0 0.0
  %1444 = vmatpush1.msra.mxu0 0.0
  %1445 = vmatprep.subr.mxu0 0.0
  %1446 = vmatpush1.msra.mxu0 0.0
  %1447 = vmatprep.subr.mxu0 0.0
  %1448 = vmatpush1.msra.mxu0 0.0
  %1449 = vmatprep.subr.mxu0 0.0
  %1450 = vmatpush1.msra.mxu0 0.0
  %1451 = vmatprep.subr.mxu0 0.0
  %1452 = vmatpush1.msra.mxu0 0.0
  %1453 = vmatprep.subr.mxu0 0.0
  %1454 = vmatpush1.msra.mxu0 0.0
  %1455 = vmatprep.subr.mxu0 0.0
  %1456 = vmatpush1.msra.mxu0 0.0
  %1457 = vmatprep.subr.mxu0 0.0
  %1458 = vmatpush1.msra.mxu0 0.0
  %1459 = vmatprep.subr.mxu0 0.0
  %1460 = vmatpush1.msra.mxu0 0.0
  %1461 = vmatprep.subr.mxu0 0.0
  %1462 = vmatpush1.msra.mxu0 0.0
  %1463 = vmatprep.subr.mxu0 0.0
  %1464 = vmatpush1.msra.mxu0 0.0
  %1465 = vmatprep.mubr.f32.mxu0 0.0
  %1466 = vmatmul.mubr.f32.gmra.mrb[0].mxu0 %v1390
  %v1467 = vpop.f32.mrb[0].mxu0
  %v1468 = vadd.f32 0.0, %v1467
  %v1469 = vpop.f32.mrb[0].mxu0
  %1470 = vmatprep.mubr.f32.mxu0 0.0
  %1471 = vmatmul.mubr.f32.gmra.mrb[0].mxu0 %v1393
  %v1472 = vpop.f32.mrb[0].mxu0
  %v1473 = vadd.f32 0.0, %v1472
  %v1474 = vpop.f32.mrb[0].mxu0
  %1475 = vmatprep.mubr.f32.mxu0 0.0
  %1476 = vmatmul.mubr.f32.gmra.mrb[0].mxu0 %v1396
  %v1477 = vpop.f32.mrb[0].mxu0
  %v1478 = vadd.f32 0.0, %v1477
  %v1479 = vpop.f32.mrb[0].mxu0
  %1480 = vmatprep.mubr.f32.mxu0 0.0
  %1481 = vmatmul.mubr.f32.gmra.mrb[0].mxu0 %v1399
  %v1482 = vpop.f32.mrb[0].mxu0
  %v1483 = vadd.f32 0.0, %v1482
  %v1484 = vpop.f32.mrb[0].mxu0
  %1485 = vdwg.mxu0
  %v1486 = vadd.f32 %v1385, %v1468
  %v1487 = vadd.f32 %v1386, %v1473
  %v1488 = vadd.f32 %v1387, %v1478
  %v1489 = vadd.f32 %v1388, %v1483
  %s1490 = scalar_lea.vmem %s3, 1
  %v1491 = vld [vmem:[%s1490] sm:$0x1]
  %v1493 = vlaneseq
  %v1494 = vshrl.u32 %v1493, 7
  %v1495 = vsub.s32 0, %v1494
  %v1496 = vrot.slane %v1491, %v1495
  %v1498 = vadd.f32 %v1486, %v1496
  %v1499 = vadd.f32 %v1487, %v1496
  %v1500 = vadd.f32 %v1488, %v1496
  %v1501 = vadd.f32 %v1489, %v1496
  %vm1502 = vcmp.ge.f32.partialorder %v1498, 0.0
  %vm1503 = vcmp.ge.f32.partialorder %v1499, 0.0
  %vm1504 = vcmp.ge.f32.partialorder %v1500, 0.0
  %vm1505 = vcmp.ge.f32.partialorder %v1501, 0.0
  %v1506 = vmul.f32 %v1498, 0.1
  %v1507 = vmul.f32 %v1499, 0.1
  %v1508 = vmul.f32 %v1500, 0.1
  %v1509 = vmul.f32 %v1501, 0.1
  %v1510 = vsel %vm1502, %v1498, %v1506
  %v1511 = vsel %vm1503, %v1499, %v1507
  %v1512 = vsel %vm1504, %v1500, %v1508
  %v1513 = vsel %vm1505, %v1501, %v1509
  %1514 = vmatprep.subr.mxu0 0.0
  %1515 = vmatpush1.msra.mxu0 %v1510
  %1516 = vmatprep.subr.mxu0 0.0
  %1517 = vmatpush1.msra.mxu0 %v1511
  %1518 = vmatprep.subr.mxu0 0.0
  %1519 = vmatpush1.msra.mxu0 %v1512
  %1520 = vmatprep.subr.mxu0 0.0
  %1521 = vmatpush1.msra.mxu0 %v1513
  %1522 = vmatprep.subr.mxu0 0.0
  %1523 = vmatpush1.msra.mxu0 0.0
  %1524 = vmatprep.subr.mxu0 0.0
  %1525 = vmatpush1.msra.mxu0 0.0
  %1526 = vmatprep.subr.mxu0 0.0
  %1527 = vmatpush1.msra.mxu0 0.0
  %1528 = vmatprep.subr.mxu0 0.0
  %1529 = vmatpush1.msra.mxu0 0.0
  %1530 = vmatprep.subr.mxu0 0.0
  %1531 = vmatpush1.msra.mxu0 0.0
  %1532 = vmatprep.subr.mxu0 0.0
  %1533 = vmatpush1.msra.mxu0 0.0
  %1534 = vmatprep.subr.mxu0 0.0
  %1535 = vmatpush1.msra.mxu0 0.0
  %1536 = vmatprep.subr.mxu0 0.0
  %1537 = vmatpush1.msra.mxu0 0.0
  %1538 = vmatprep.subr.mxu0 0.0
  %1539 = vmatpush1.msra.mxu0 0.0
  %1540 = vmatprep.subr.mxu0 0.0
  %1541 = vmatpush1.msra.mxu0 0.0
  %1542 = vmatprep.subr.mxu0 0.0
  %1543 = vmatpush1.msra.mxu0 0.0
  %1544 = vmatprep.subr.mxu0 0.0
  %1545 = vmatpush1.msra.mxu0 0.0
  %1546 = vmatprep.subr.mxu0 0.0
  %1547 = vmatpush1.msra.mxu0 0.0
  %1548 = vmatprep.subr.mxu0 0.0
  %1549 = vmatpush1.msra.mxu0 0.0
  %1550 = vmatprep.subr.mxu0 0.0
  %1551 = vmatpush1.msra.mxu0 0.0
  %1552 = vmatprep.subr.mxu0 0.0
  %1553 = vmatpush1.msra.mxu0 0.0
  %1554 = vmatprep.subr.mxu0 0.0
  %1555 = vmatpush1.msra.mxu0 0.0
  %1556 = vmatprep.subr.mxu0 0.0
  %1557 = vmatpush1.msra.mxu0 0.0
  %1558 = vmatprep.subr.mxu0 0.0
  %1559 = vmatpush1.msra.mxu0 0.0
  %1560 = vmatprep.subr.mxu0 0.0
  %1561 = vmatpush1.msra.mxu0 0.0
  %1562 = vmatprep.subr.mxu0 0.0
  %1563 = vmatpush1.msra.mxu0 0.0
  %1564 = vmatprep.subr.mxu0 0.0
  %1565 = vmatpush1.msra.mxu0 0.0
  %1566 = vmatprep.subr.mxu0 0.0
  %1567 = vmatpush1.msra.mxu0 0.0
  %1568 = vmatprep.subr.mxu0 0.0
  %1569 = vmatpush1.msra.mxu0 0.0
  %1570 = vmatprep.subr.mxu0 0.0
  %1571 = vmatpush1.msra.mxu0 0.0
  %1572 = vmatprep.subr.mxu0 0.0
  %1573 = vmatpush1.msra.mxu0 0.0
  %1574 = vmatprep.subr.mxu0 0.0
  %1575 = vmatpush1.msra.mxu0 0.0
  %1576 = vmatprep.subr.mxu0 0.0
  %1577 = vmatpush1.msra.mxu0 0.0
  %1578 = vmatprep.mubr.f32.mxu0 0.0
  %1579 = vmatmul.mubr.f32.gmra.mrb[0].mxu0 %v43
  %v1580 = vpop.f32.mrb[0].mxu0
  %v1581 = vadd.f32 0.0, %v1580
  %v1582 = vpop.f32.mrb[0].mxu0
  %1583 = vmatprep.mubr.f32.mxu0 0.0
  %1584 = vmatmul.mubr.f32.gmra.mrb[0].mxu0 %v46
  %v1585 = vpop.f32.mrb[0].mxu0
  %v1586 = vadd.f32 0.0, %v1585
  %v1587 = vpop.f32.mrb[0].mxu0
  %1588 = vmatprep.mubr.f32.mxu0 0.0
  %1589 = vmatmul.mubr.f32.gmra.mrb[0].mxu0 %v49
  %v1590 = vpop.f32.mrb[0].mxu0
  %v1591 = vadd.f32 0.0, %v1590
  %v1592 = vpop.f32.mrb[0].mxu0
  %1593 = vmatprep.mubr.f32.mxu0 0.0
  %1594 = vmatmul.mubr.f32.gmra.mrb[0].mxu0 %v52
  %v1595 = vpop.f32.mrb[0].mxu0
  %v1596 = vadd.f32 0.0, %v1595
  %v1597 = vpop.f32.mrb[0].mxu0
  %1598 = vmatprep.mubr.f32.mxu0 0.0
  %1599 = vmatmul.mubr.f32.gmra.mrb[0].mxu0 %v55
  %v1600 = vpop.f32.mrb[0].mxu0
  %v1601 = vadd.f32 0.0, %v1600
  %v1602 = vpop.f32.mrb[0].mxu0
  %1603 = vmatprep.mubr.f32.mxu0 0.0
  %1604 = vmatmul.mubr.f32.gmra.mrb[0].mxu0 %v58
  %v1605 = vpop.f32.mrb[0].mxu0
  %v1606 = vadd.f32 0.0, %v1605
  %v1607 = vpop.f32.mrb[0].mxu0
  %1608 = vmatprep.mubr.f32.mxu0 0.0
  %1609 = vmatmul.mubr.f32.gmra.mrb[0].mxu0 %v61
  %v1610 = vpop.f32.mrb[0].mxu0
  %v1611 = vadd.f32 0.0, %v1610
  %v1612 = vpop.f32.mrb[0].mxu0
  %1613 = vmatprep.mubr.f32.mxu0 0.0
  %1614 = vmatmul.mubr.f32.gmra.mrb[0].mxu0 %v64
  %v1615 = vpop.f32.mrb[0].mxu0
  %v1616 = vadd.f32 0.0, %v1615
  %v1617 = vpop.f32.mrb[0].mxu0
  %1618 = vmatprep.mubr.f32.mxu0 0.0
  %1619 = vmatmul.mubr.f32.gmra.mrb[0].mxu0 %v67
  %v1620 = vpop.f32.mrb[0].mxu0
  %v1621 = vadd.f32 0.0, %v1620
  %v1622 = vpop.f32.mrb[0].mxu0
  %1623 = vmatprep.mubr.f32.mxu0 0.0
  %1624 = vmatmul.mubr.f32.gmra.mrb[0].mxu0 %v70
  %v1625 = vpop.f32.mrb[0].mxu0
  %v1626 = vadd.f32 0.0, %v1625
  %v1627 = vpop.f32.mrb[0].mxu0
  %1628 = vmatprep.mubr.f32.mxu0 0.0
  %1629 = vmatmul.mubr.f32.gmra.mrb[0].mxu0 %v73
  %v1630 = vpop.f32.mrb[0].mxu0
  %v1631 = vadd.f32 0.0, %v1630
  %v1632 = vpop.f32.mrb[0].mxu0
  %1633 = vmatprep.mubr.f32.mxu0 0.0
  %1634 = vmatmul.mubr.f32.gmra.mrb[0].mxu0 %v76
  %v1635 = vpop.f32.mrb[0].mxu0
  %v1636 = vadd.f32 0.0, %v1635
  %v1637 = vpop.f32.mrb[0].mxu0
  %1638 = vmatprep.mubr.f32.mxu0 0.0
  %1639 = vmatmul.mubr.f32.gmra.mrb[0].mxu0 %v79
  %v1640 = vpop.f32.mrb[0].mxu0
  %v1641 = vadd.f32 0.0, %v1640
  %v1642 = vpop.f32.mrb[0].mxu0
  %1643 = vmatprep.mubr.f32.mxu0 0.0
  %1644 = vmatmul.mubr.f32.gmra.mrb[0].mxu0 %v82
  %v1645 = vpop.f32.mrb[0].mxu0
  %v1646 = vadd.f32 0.0, %v1645
  %v1647 = vpop.f32.mrb[0].mxu0
  %1648 = vmatprep.mubr.f32.mxu0 0.0
  %1649 = vmatmul.mubr.f32.gmra.mrb[0].mxu0 %v85
  %v1650 = vpop.f32.mrb[0].mxu0
  %v1651 = vadd.f32 0.0, %v1650
  %v1652 = vpop.f32.mrb[0].mxu0
  %1653 = vmatprep.mubr.f32.mxu0 0.0
  %1654 = vmatmul.mubr.f32.gmra.mrb[0].mxu0 %v88
  %v1655 = vpop.f32.mrb[0].mxu0
  %v1656 = vadd.f32 0.0, %v1655
  %v1657 = vpop.f32.mrb[0].mxu0
  %1658 = vmatprep.mubr.f32.mxu0 0.0
  %1659 = vmatmul.mubr.f32.gmra.mrb[0].mxu0 %v91
  %v1660 = vpop.f32.mrb[0].mxu0
  %v1661 = vadd.f32 0.0, %v1660
  %v1662 = vpop.f32.mrb[0].mxu0
  %1663 = vmatprep.mubr.f32.mxu0 0.0
  %1664 = vmatmul.mubr.f32.gmra.mrb[0].mxu0 %v94
  %v1665 = vpop.f32.mrb[0].mxu0
  %v1666 = vadd.f32 0.0, %v1665
  %v1667 = vpop.f32.mrb[0].mxu0
  %1668 = vmatprep.mubr.f32.mxu0 0.0
  %1669 = vmatmul.mubr.f32.gmra.mrb[0].mxu0 %v97
  %v1670 = vpop.f32.mrb[0].mxu0
  %v1671 = vadd.f32 0.0, %v1670
  %v1672 = vpop.f32.mrb[0].mxu0
  %1673 = vmatprep.mubr.f32.mxu0 0.0
  %1674 = vmatmul.mubr.f32.gmra.mrb[0].mxu0 %v100
  %v1675 = vpop.f32.mrb[0].mxu0
  %v1676 = vadd.f32 0.0, %v1675
  %v1677 = vpop.f32.mrb[0].mxu0
  %1678 = vdwg.mxu0
  %s1679 = scalar_lea.vmem %s2, 320
  %v1680 = vld [vmem:[%s1679] sm:$0xff]
  %v1681 = vld [vmem:[%s1679 + $0x8] sm:$0xff]
  %v1682 = vld [vmem:[%s1679 + $0x10] sm:$0xff]
  %v1683 = vld [vmem:[%s1679 + $0x18] sm:$0xff]
  %v1684 = vld [vmem:[%s1679 + $0x20] sm:$0xff]
  %v1685 = vld [vmem:[%s1679 + $0x28] sm:$0xff]
  %v1686 = vld [vmem:[%s1679 + $0x30] sm:$0xff]
  %v1687 = vld [vmem:[%s1679 + $0x38] sm:$0xff]
  %v1688 = vld [vmem:[%s1679 + $0x40] sm:$0xff]
  %v1689 = vld [vmem:[%s1679 + $0x48] sm:$0xff]
  %v1690 = vld [vmem:[%s1679 + $0x50] sm:$0xff]
  %v1691 = vld [vmem:[%s1679 + $0x58] sm:$0xff]
  %v1692 = vld [vmem:[%s1679 + $0x60] sm:$0xff]
  %v1693 = vld [vmem:[%s1679 + $0x68] sm:$0xff]
  %v1694 = vld [vmem:[%s1679 + $0x70] sm:$0xff]
  %v1695 = vld [vmem:[%s1679 + $0x78] sm:$0xff]
  %v1696 = vld [vmem:[%s1679 + $0x80] sm:$0xff]
  %v1697 = vld [vmem:[%s1679 + $0x88] sm:$0xff]
  %v1698 = vld [vmem:[%s1679 + $0x90] sm:$0xff]
  %v1699 = vld [vmem:[%s1679 + $0x98] sm:$0xff]
  %v1701 = vsel %vm41, %v1601, 0
  %v1704 = vsel %vm41, %v1606, 0
  %v1707 = vsel %vm41, %v1611, 0
  %v1710 = vsel %vm41, %v1616, 0
  %1712 = vmatprep.subr.mxu0 0.0
  %1713 = vmatpush1.msra.mxu0 %v1684
  %1714 = vmatprep.subr.mxu0 0.0
  %1715 = vmatpush1.msra.mxu0 %v1685
  %1716 = vmatprep.subr.mxu0 0.0
  %1717 = vmatpush1.msra.mxu0 %v1686
  %1718 = vmatprep.subr.mxu0 0.0
  %1719 = vmatpush1.msra.mxu0 %v1687
  %1720 = vmatprep.subr.mxu0 0.0
  %1721 = vmatpush1.msra.mxu0 0.0
  %1722 = vmatprep.subr.mxu0 0.0
  %1723 = vmatpush1.msra.mxu0 0.0
  %1724 = vmatprep.subr.mxu0 0.0
  %1725 = vmatpush1.msra.mxu0 0.0
  %1726 = vmatprep.subr.mxu0 0.0
  %1727 = vmatpush1.msra.mxu0 0.0
  %1728 = vmatprep.subr.mxu0 0.0
  %1729 = vmatpush1.msra.mxu0 0.0
  %1730 = vmatprep.subr.mxu0 0.0
  %1731 = vmatpush1.msra.mxu0 0.0
  %1732 = vmatprep.subr.mxu0 0.0
  %1733 = vmatpush1.msra.mxu0 0.0
  %1734 = vmatprep.subr.mxu0 0.0
  %1735 = vmatpush1.msra.mxu0 0.0
  %1736 = vmatprep.subr.mxu0 0.0
  %1737 = vmatpush1.msra.mxu0 0.0
  %1738 = vmatprep.subr.mxu0 0.0
  %1739 = vmatpush1.msra.mxu0 0.0
  %1740 = vmatprep.subr.mxu0 0.0
  %1741 = vmatpush1.msra.mxu0 0.0
  %1742 = vmatprep.subr.mxu0 0.0
  %1743 = vmatpush1.msra.mxu0 0.0
  %1744 = vmatprep.subr.mxu0 0.0
  %1745 = vmatpush1.msra.mxu0 0.0
  %1746 = vmatprep.subr.mxu0 0.0
  %1747 = vmatpush1.msra.mxu0 0.0
  %1748 = vmatprep.subr.mxu0 0.0
  %1749 = vmatpush1.msra.mxu0 0.0
  %1750 = vmatprep.subr.mxu0 0.0
  %1751 = vmatpush1.msra.mxu0 0.0
  %1752 = vmatprep.subr.mxu0 0.0
  %1753 = vmatpush1.msra.mxu0 0.0
  %1754 = vmatprep.subr.mxu0 0.0
  %1755 = vmatpush1.msra.mxu0 0.0
  %1756 = vmatprep.subr.mxu0 0.0
  %1757 = vmatpush1.msra.mxu0 0.0
  %1758 = vmatprep.subr.mxu0 0.0
  %1759 = vmatpush1.msra.mxu0 0.0
  %1760 = vmatprep.subr.mxu0 0.0
  %1761 = vmatpush1.msra.mxu0 0.0
  %1762 = vmatprep.subr.mxu0 0.0
  %1763 = vmatpush1.msra.mxu0 0.0
  %1764 = vmatprep.subr.mxu0 0.0
  %1765 = vmatpush1.msra.mxu0 0.0
  %1766 = vmatprep.subr.mxu0 0.0
  %1767 = vmatpush1.msra.mxu0 0.0
  %1768 = vmatprep.subr.mxu0 0.0
  %1769 = vmatpush1.msra.mxu0 0.0
  %1770 = vmatprep.subr.mxu0 0.0
  %1771 = vmatpush1.msra.mxu0 0.0
  %1772 = vmatprep.subr.mxu0 0.0
  %1773 = vmatpush1.msra.mxu0 0.0
  %1774 = vmatprep.subr.mxu0 0.0
  %1775 = vmatpush1.msra.mxu0 0.0
  %1776 = vmatprep.mubr.f32.mxu0 0.0
  %1777 = vmatmul.mubr.f32.gmra.mrb[0].mxu0 %v1701
  %v1778 = vpop.f32.mrb[0].mxu0
  %v1779 = vadd.f32 0.0, %v1778
  %v1780 = vpop.f32.mrb[0].mxu0
  %1781 = vmatprep.mubr.f32.mxu0 0.0
  %1782 = vmatmul.mubr.f32.gmra.mrb[0].mxu0 %v1704
  %v1783 = vpop.f32.mrb[0].mxu0
  %v1784 = vadd.f32 0.0, %v1783
  %v1785 = vpop.f32.mrb[0].mxu0
  %1786 = vmatprep.mubr.f32.mxu0 0.0
  %1787 = vmatmul.mubr.f32.gmra.mrb[0].mxu0 %v1707
  %v1788 = vpop.f32.mrb[0].mxu0
  %v1789 = vadd.f32 0.0, %v1788
  %v1790 = vpop.f32.mrb[0].mxu0
  %1791 = vmatprep.mubr.f32.mxu0 0.0
  %1792 = vmatmul.mubr.f32.gmra.mrb[0].mxu0 %v1710
  %v1793 = vpop.f32.mrb[0].mxu0
  %v1794 = vadd.f32 0.0, %v1793
  %v1795 = vpop.f32.mrb[0].mxu0
  %1796 = vdwg.mxu0
  %v1798 = vsel %vm41, %v1581, 0
  %v1801 = vsel %vm41, %v1586, 0
  %v1804 = vsel %vm41, %v1591, 0
  %v1807 = vsel %vm41, %v1596, 0
  %1809 = vmatprep.subr.mxu0 0.0
  %1810 = vmatpush1.msra.mxu0 %v1680
  %1811 = vmatprep.subr.mxu0 0.0
  %1812 = vmatpush1.msra.mxu0 %v1681
  %1813 = vmatprep.subr.mxu0 0.0
  %1814 = vmatpush1.msra.mxu0 %v1682
  %1815 = vmatprep.subr.mxu0 0.0
  %1816 = vmatpush1.msra.mxu0 %v1683
  %1817 = vmatprep.subr.mxu0 0.0
  %1818 = vmatpush1.msra.mxu0 0.0
  %1819 = vmatprep.subr.mxu0 0.0
  %1820 = vmatpush1.msra.mxu0 0.0
  %1821 = vmatprep.subr.mxu0 0.0
  %1822 = vmatpush1.msra.mxu0 0.0
  %1823 = vmatprep.subr.mxu0 0.0
  %1824 = vmatpush1.msra.mxu0 0.0
  %1825 = vmatprep.subr.mxu0 0.0
  %1826 = vmatpush1.msra.mxu0 0.0
  %1827 = vmatprep.subr.mxu0 0.0
  %1828 = vmatpush1.msra.mxu0 0.0
  %1829 = vmatprep.subr.mxu0 0.0
  %1830 = vmatpush1.msra.mxu0 0.0
  %1831 = vmatprep.subr.mxu0 0.0
  %1832 = vmatpush1.msra.mxu0 0.0
  %1833 = vmatprep.subr.mxu0 0.0
  %1834 = vmatpush1.msra.mxu0 0.0
  %1835 = vmatprep.subr.mxu0 0.0
  %1836 = vmatpush1.msra.mxu0 0.0
  %1837 = vmatprep.subr.mxu0 0.0
  %1838 = vmatpush1.msra.mxu0 0.0
  %1839 = vmatprep.subr.mxu0 0.0
  %1840 = vmatpush1.msra.mxu0 0.0
  %1841 = vmatprep.subr.mxu0 0.0
  %1842 = vmatpush1.msra.mxu0 0.0
  %1843 = vmatprep.subr.mxu0 0.0
  %1844 = vmatpush1.msra.mxu0 0.0
  %1845 = vmatprep.subr.mxu0 0.0
  %1846 = vmatpush1.msra.mxu0 0.0
  %1847 = vmatprep.subr.mxu0 0.0
  %1848 = vmatpush1.msra.mxu0 0.0
  %1849 = vmatprep.subr.mxu0 0.0
  %1850 = vmatpush1.msra.mxu0 0.0
  %1851 = vmatprep.subr.mxu0 0.0
  %1852 = vmatpush1.msra.mxu0 0.0
  %1853 = vmatprep.subr.mxu0 0.0
  %1854 = vmatpush1.msra.mxu0 0.0
  %1855 = vmatprep.subr.mxu0 0.0
  %1856 = vmatpush1.msra.mxu0 0.0
  %1857 = vmatprep.subr.mxu0 0.0
  %1858 = vmatpush1.msra.mxu0 0.0
  %1859 = vmatprep.subr.mxu0 0.0
  %1860 = vmatpush1.msra.mxu0 0.0
  %1861 = vmatprep.subr.mxu0 0.0
  %1862 = vmatpush1.msra.mxu0 0.0
  %1863 = vmatprep.subr.mxu0 0.0
  %1864 = vmatpush1.msra.mxu0 0.0
  %1865 = vmatprep.subr.mxu0 0.0
  %1866 = vmatpush1.msra.mxu0 0.0
  %1867 = vmatprep.subr.mxu0 0.0
  %1868 = vmatpush1.msra.mxu0 0.0
  %1869 = vmatprep.subr.mxu0 0.0
  %1870 = vmatpush1.msra.mxu0 0.0
  %1871 = vmatprep.subr.mxu0 0.0
  %1872 = vmatpush1.msra.mxu0 0.0
  %1873 = vmatprep.mubr.f32.mxu0 0.0
  %1874 = vmatmul.mubr.f32.gmra.mrb[0].mxu0 %v1798
  %v1875 = vpop.f32.mrb[0].mxu0
  %v1876 = vadd.f32 %v1779, %v1875
  %v1877 = vpop.f32.mrb[0].mxu0
  %1878 = vmatprep.mubr.f32.mxu0 0.0
  %1879 = vmatmul.mubr.f32.gmra.mrb[0].mxu0 %v1801
  %v1880 = vpop.f32.mrb[0].mxu0
  %v1881 = vadd.f32 %v1784, %v1880
  %v1882 = vpop.f32.mrb[0].mxu0
  %1883 = vmatprep.mubr.f32.mxu0 0.0
  %1884 = vmatmul.mubr.f32.gmra.mrb[0].mxu0 %v1804
  %v1885 = vpop.f32.mrb[0].mxu0
  %v1886 = vadd.f32 %v1789, %v1885
  %v1887 = vpop.f32.mrb[0].mxu0
  %1888 = vmatprep.mubr.f32.mxu0 0.0
  %1889 = vmatmul.mubr.f32.gmra.mrb[0].mxu0 %v1807
  %v1890 = vpop.f32.mrb[0].mxu0
  %v1891 = vadd.f32 %v1794, %v1890
  %v1892 = vpop.f32.mrb[0].mxu0
  %1893 = vdwg.mxu0
  %v1895 = vsel %vm41, %v1621, 0
  %v1898 = vsel %vm41, %v1626, 0
  %v1901 = vsel %vm41, %v1631, 0
  %v1904 = vsel %vm41, %v1636, 0
  %1906 = vmatprep.subr.mxu0 0.0
  %1907 = vmatpush1.msra.mxu0 %v1688
  %1908 = vmatprep.subr.mxu0 0.0
  %1909 = vmatpush1.msra.mxu0 %v1689
  %1910 = vmatprep.subr.mxu0 0.0
  %1911 = vmatpush1.msra.mxu0 %v1690
  %1912 = vmatprep.subr.mxu0 0.0
  %1913 = vmatpush1.msra.mxu0 %v1691
  %1914 = vmatprep.subr.mxu0 0.0
  %1915 = vmatpush1.msra.mxu0 0.0
  %1916 = vmatprep.subr.mxu0 0.0
  %1917 = vmatpush1.msra.mxu0 0.0
  %1918 = vmatprep.subr.mxu0 0.0
  %1919 = vmatpush1.msra.mxu0 0.0
  %1920 = vmatprep.subr.mxu0 0.0
  %1921 = vmatpush1.msra.mxu0 0.0
  %1922 = vmatprep.subr.mxu0 0.0
  %1923 = vmatpush1.msra.mxu0 0.0
  %1924 = vmatprep.subr.mxu0 0.0
  %1925 = vmatpush1.msra.mxu0 0.0
  %1926 = vmatprep.subr.mxu0 0.0
  %1927 = vmatpush1.msra.mxu0 0.0
  %1928 = vmatprep.subr.mxu0 0.0
  %1929 = vmatpush1.msra.mxu0 0.0
  %1930 = vmatprep.subr.mxu0 0.0
  %1931 = vmatpush1.msra.mxu0 0.0
  %1932 = vmatprep.subr.mxu0 0.0
  %1933 = vmatpush1.msra.mxu0 0.0
  %1934 = vmatprep.subr.mxu0 0.0
  %1935 = vmatpush1.msra.mxu0 0.0
  %1936 = vmatprep.subr.mxu0 0.0
  %1937 = vmatpush1.msra.mxu0 0.0
  %1938 = vmatprep.subr.mxu0 0.0
  %1939 = vmatpush1.msra.mxu0 0.0
  %1940 = vmatprep.subr.mxu0 0.0
  %1941 = vmatpush1.msra.mxu0 0.0
  %1942 = vmatprep.subr.mxu0 0.0
  %1943 = vmatpush1.msra.mxu0 0.0
  %1944 = vmatprep.subr.mxu0 0.0
  %1945 = vmatpush1.msra.mxu0 0.0
  %1946 = vmatprep.subr.mxu0 0.0
  %1947 = vmatpush1.msra.mxu0 0.0
  %1948 = vmatprep.subr.mxu0 0.0
  %1949 = vmatpush1.msra.mxu0 0.0
  %1950 = vmatprep.subr.mxu0 0.0
  %1951 = vmatpush1.msra.mxu0 0.0
  %1952 = vmatprep.subr.mxu0 0.0
  %1953 = vmatpush1.msra.mxu0 0.0
  %1954 = vmatprep.subr.mxu0 0.0
  %1955 = vmatpush1.msra.mxu0 0.0
  %1956 = vmatprep.subr.mxu0 0.0
  %1957 = vmatpush1.msra.mxu0 0.0
  %1958 = vmatprep.subr.mxu0 0.0
  %1959 = vmatpush1.msra.mxu0 0.0
  %1960 = vmatprep.subr.mxu0 0.0
  %1961 = vmatpush1.msra.mxu0 0.0
  %1962 = vmatprep.subr.mxu0 0.0
  %1963 = vmatpush1.msra.mxu0 0.0
  %1964 = vmatprep.subr.mxu0 0.0
  %1965 = vmatpush1.msra.mxu0 0.0
  %1966 = vmatprep.subr.mxu0 0.0
  %1967 = vmatpush1.msra.mxu0 0.0
  %1968 = vmatprep.subr.mxu0 0.0
  %1969 = vmatpush1.msra.mxu0 0.0
  %1970 = vmatprep.mubr.f32.mxu0 0.0
  %1971 = vmatmul.mubr.f32.gmra.mrb[0].mxu0 %v1895
  %v1972 = vpop.f32.mrb[0].mxu0
  %v1973 = vadd.f32 0.0, %v1972
  %v1974 = vpop.f32.mrb[0].mxu0
  %1975 = vmatprep.mubr.f32.mxu0 0.0
  %1976 = vmatmul.mubr.f32.gmra.mrb[0].mxu0 %v1898
  %v1977 = vpop.f32.mrb[0].mxu0
  %v1978 = vadd.f32 0.0, %v1977
  %v1979 = vpop.f32.mrb[0].mxu0
  %1980 = vmatprep.mubr.f32.mxu0 0.0
  %1981 = vmatmul.mubr.f32.gmra.mrb[0].mxu0 %v1901
  %v1982 = vpop.f32.mrb[0].mxu0
  %v1983 = vadd.f32 0.0, %v1982
  %v1984 = vpop.f32.mrb[0].mxu0
  %1985 = vmatprep.mubr.f32.mxu0 0.0
  %1986 = vmatmul.mubr.f32.gmra.mrb[0].mxu0 %v1904
  %v1987 = vpop.f32.mrb[0].mxu0
  %v1988 = vadd.f32 0.0, %v1987
  %v1989 = vpop.f32.mrb[0].mxu0
  %1990 = vdwg.mxu0
  %v1991 = vadd.f32 %v1876, %v1973
  %v1992 = vadd.f32 %v1881, %v1978
  %v1993 = vadd.f32 %v1886, %v1983
  %v1994 = vadd.f32 %v1891, %v1988
  %v1996 = vsel %vm41, %v1641, 0
  %v1999 = vsel %vm41, %v1646, 0
  %v2002 = vsel %vm41, %v1651, 0
  %v2005 = vsel %vm41, %v1656, 0
  %2007 = vmatprep.subr.mxu0 0.0
  %2008 = vmatpush1.msra.mxu0 %v1692
  %2009 = vmatprep.subr.mxu0 0.0
  %2010 = vmatpush1.msra.mxu0 %v1693
  %2011 = vmatprep.subr.mxu0 0.0
  %2012 = vmatpush1.msra.mxu0 %v1694
  %2013 = vmatprep.subr.mxu0 0.0
  %2014 = vmatpush1.msra.mxu0 %v1695
  %2015 = vmatprep.subr.mxu0 0.0
  %2016 = vmatpush1.msra.mxu0 0.0
  %2017 = vmatprep.subr.mxu0 0.0
  %2018 = vmatpush1.msra.mxu0 0.0
  %2019 = vmatprep.subr.mxu0 0.0
  %2020 = vmatpush1.msra.mxu0 0.0
  %2021 = vmatprep.subr.mxu0 0.0
  %2022 = vmatpush1.msra.mxu0 0.0
  %2023 = vmatprep.subr.mxu0 0.0
  %2024 = vmatpush1.msra.mxu0 0.0
  %2025 = vmatprep.subr.mxu0 0.0
  %2026 = vmatpush1.msra.mxu0 0.0
  %2027 = vmatprep.subr.mxu0 0.0
  %2028 = vmatpush1.msra.mxu0 0.0
  %2029 = vmatprep.subr.mxu0 0.0
  %2030 = vmatpush1.msra.mxu0 0.0
  %2031 = vmatprep.subr.mxu0 0.0
  %2032 = vmatpush1.msra.mxu0 0.0
  %2033 = vmatprep.subr.mxu0 0.0
  %2034 = vmatpush1.msra.mxu0 0.0
  %2035 = vmatprep.subr.mxu0 0.0
  %2036 = vmatpush1.msra.mxu0 0.0
  %2037 = vmatprep.subr.mxu0 0.0
  %2038 = vmatpush1.msra.mxu0 0.0
  %2039 = vmatprep.subr.mxu0 0.0
  %2040 = vmatpush1.msra.mxu0 0.0
  %2041 = vmatprep.subr.mxu0 0.0
  %2042 = vmatpush1.msra.mxu0 0.0
  %2043 = vmatprep.subr.mxu0 0.0
  %2044 = vmatpush1.msra.mxu0 0.0
  %2045 = vmatprep.subr.mxu0 0.0
  %2046 = vmatpush1.msra.mxu0 0.0
  %2047 = vmatprep.subr.mxu0 0.0
  %2048 = vmatpush1.msra.mxu0 0.0
  %2049 = vmatprep.subr.mxu0 0.0
  %2050 = vmatpush1.msra.mxu0 0.0
  %2051 = vmatprep.subr.mxu0 0.0
  %2052 = vmatpush1.msra.mxu0 0.0
  %2053 = vmatprep.subr.mxu0 0.0
  %2054 = vmatpush1.msra.mxu0 0.0
  %2055 = vmatprep.subr.mxu0 0.0
  %2056 = vmatpush1.msra.mxu0 0.0
  %2057 = vmatprep.subr.mxu0 0.0
  %2058 = vmatpush1.msra.mxu0 0.0
  %2059 = vmatprep.subr.mxu0 0.0
  %2060 = vmatpush1.msra.mxu0 0.0
  %2061 = vmatprep.subr.mxu0 0.0
  %2062 = vmatpush1.msra.mxu0 0.0
  %2063 = vmatprep.subr.mxu0 0.0
  %2064 = vmatpush1.msra.mxu0 0.0
  %2065 = vmatprep.subr.mxu0 0.0
  %2066 = vmatpush1.msra.mxu0 0.0
  %2067 = vmatprep.subr.mxu0 0.0
  %2068 = vmatpush1.msra.mxu0 0.0
  %2069 = vmatprep.subr.mxu0 0.0
  %2070 = vmatpush1.msra.mxu0 0.0
  %2071 = vmatprep.mubr.f32.mxu0 0.0
  %2072 = vmatmul.mubr.f32.gmra.mrb[0].mxu0 %v1996
  %v2073 = vpop.f32.mrb[0].mxu0
  %v2074 = vadd.f32 0.0, %v2073
  %v2075 = vpop.f32.mrb[0].mxu0
  %2076 = vmatprep.mubr.f32.mxu0 0.0
  %2077 = vmatmul.mubr.f32.gmra.mrb[0].mxu0 %v1999
  %v2078 = vpop.f32.mrb[0].mxu0
  %v2079 = vadd.f32 0.0, %v2078
  %v2080 = vpop.f32.mrb[0].mxu0
  %2081 = vmatprep.mubr.f32.mxu0 0.0
  %2082 = vmatmul.mubr.f32.gmra.mrb[0].mxu0 %v2002
  %v2083 = vpop.f32.mrb[0].mxu0
  %v2084 = vadd.f32 0.0, %v2083
  %v2085 = vpop.f32.mrb[0].mxu0
  %2086 = vmatprep.mubr.f32.mxu0 0.0
  %2087 = vmatmul.mubr.f32.gmra.mrb[0].mxu0 %v2005
  %v2088 = vpop.f32.mrb[0].mxu0
  %v2089 = vadd.f32 0.0, %v2088
  %v2090 = vpop.f32.mrb[0].mxu0
  %2091 = vdwg.mxu0
  %v2092 = vadd.f32 %v1991, %v2074
  %v2093 = vadd.f32 %v1992, %v2079
  %v2094 = vadd.f32 %v1993, %v2084
  %v2095 = vadd.f32 %v1994, %v2089
  %v2097 = vsel %vm41, %v1661, 0
  %v2100 = vsel %vm41, %v1666, 0
  %v2103 = vsel %vm41, %v1671, 0
  %v2106 = vsel %vm41, %v1676, 0
  %2108 = vmatprep.subr.mxu0 0.0
  %2109 = vmatpush1.msra.mxu0 %v1696
  %2110 = vmatprep.subr.mxu0 0.0
  %2111 = vmatpush1.msra.mxu0 %v1697
  %2112 = vmatprep.subr.mxu0 0.0
  %2113 = vmatpush1.msra.mxu0 %v1698
  %2114 = vmatprep.subr.mxu0 0.0
  %2115 = vmatpush1.msra.mxu0 %v1699
  %2116 = vmatprep.subr.mxu0 0.0
  %2117 = vmatpush1.msra.mxu0 0.0
  %2118 = vmatprep.subr.mxu0 0.0
  %2119 = vmatpush1.msra.mxu0 0.0
  %2120 = vmatprep.subr.mxu0 0.0
  %2121 = vmatpush1.msra.mxu0 0.0
  %2122 = vmatprep.subr.mxu0 0.0
  %2123 = vmatpush1.msra.mxu0 0.0
  %2124 = vmatprep.subr.mxu0 0.0
  %2125 = vmatpush1.msra.mxu0 0.0
  %2126 = vmatprep.subr.mxu0 0.0
  %2127 = vmatpush1.msra.mxu0 0.0
  %2128 = vmatprep.subr.mxu0 0.0
  %2129 = vmatpush1.msra.mxu0 0.0
  %2130 = vmatprep.subr.mxu0 0.0
  %2131 = vmatpush1.msra.mxu0 0.0
  %2132 = vmatprep.subr.mxu0 0.0
  %2133 = vmatpush1.msra.mxu0 0.0
  %2134 = vmatprep.subr.mxu0 0.0
  %2135 = vmatpush1.msra.mxu0 0.0
  %2136 = vmatprep.subr.mxu0 0.0
  %2137 = vmatpush1.msra.mxu0 0.0
  %2138 = vmatprep.subr.mxu0 0.0
  %2139 = vmatpush1.msra.mxu0 0.0
  %2140 = vmatprep.subr.mxu0 0.0
  %2141 = vmatpush1.msra.mxu0 0.0
  %2142 = vmatprep.subr.mxu0 0.0
  %2143 = vmatpush1.msra.mxu0 0.0
  %2144 = vmatprep.subr.mxu0 0.0
  %2145 = vmatpush1.msra.mxu0 0.0
  %2146 = vmatprep.subr.mxu0 0.0
  %2147 = vmatpush1.msra.mxu0 0.0
  %2148 = vmatprep.subr.mxu0 0.0
  %2149 = vmatpush1.msra.mxu0 0.0
  %2150 = vmatprep.subr.mxu0 0.0
  %2151 = vmatpush1.msra.mxu0 0.0
  %2152 = vmatprep.subr.mxu0 0.0
  %2153 = vmatpush1.msra.mxu0 0.0
  %2154 = vmatprep.subr.mxu0 0.0
  %2155 = vmatpush1.msra.mxu0 0.0
  %2156 = vmatprep.subr.mxu0 0.0
  %2157 = vmatpush1.msra.mxu0 0.0
  %2158 = vmatprep.subr.mxu0 0.0
  %2159 = vmatpush1.msra.mxu0 0.0
  %2160 = vmatprep.subr.mxu0 0.0
  %2161 = vmatpush1.msra.mxu0 0.0
  %2162 = vmatprep.subr.mxu0 0.0
  %2163 = vmatpush1.msra.mxu0 0.0
  %2164 = vmatprep.subr.mxu0 0.0
  %2165 = vmatpush1.msra.mxu0 0.0
  %2166 = vmatprep.subr.mxu0 0.0
  %2167 = vmatpush1.msra.mxu0 0.0
  %2168 = vmatprep.subr.mxu0 0.0
  %2169 = vmatpush1.msra.mxu0 0.0
  %2170 = vmatprep.subr.mxu0 0.0
  %2171 = vmatpush1.msra.mxu0 0.0
  %2172 = vmatprep.mubr.f32.mxu0 0.0
  %2173 = vmatmul.mubr.f32.gmra.mrb[0].mxu0 %v2097
  %v2174 = vpop.f32.mrb[0].mxu0
  %v2175 = vadd.f32 0.0, %v2174
  %v2176 = vpop.f32.mrb[0].mxu0
  %2177 = vmatprep.mubr.f32.mxu0 0.0
  %2178 = vmatmul.mubr.f32.gmra.mrb[0].mxu0 %v2100
  %v2179 = vpop.f32.mrb[0].mxu0
  %v2180 = vadd.f32 0.0, %v2179
  %v2181 = vpop.f32.mrb[0].mxu0
  %2182 = vmatprep.mubr.f32.mxu0 0.0
  %2183 = vmatmul.mubr.f32.gmra.mrb[0].mxu0 %v2103
  %v2184 = vpop.f32.mrb[0].mxu0
  %v2185 = vadd.f32 0.0, %v2184
  %v2186 = vpop.f32.mrb[0].mxu0
  %2187 = vmatprep.mubr.f32.mxu0 0.0
  %2188 = vmatmul.mubr.f32.gmra.mrb[0].mxu0 %v2106
  %v2189 = vpop.f32.mrb[0].mxu0
  %v2190 = vadd.f32 0.0, %v2189
  %v2191 = vpop.f32.mrb[0].mxu0
  %2192 = vdwg.mxu0
  %v2193 = vadd.f32 %v2092, %v2175
  %v2194 = vadd.f32 %v2093, %v2180
  %v2195 = vadd.f32 %v2094, %v2185
  %v2196 = vadd.f32 %v2095, %v2190
  %s2197 = scalar_lea.vmem %s3, 2
  %v2198 = vld [vmem:[%s2197] sm:$0x1]
  %v2200 = vlaneseq
  %v2201 = vshrl.u32 %v2200, 7
  %v2202 = vsub.s32 0, %v2201
  %v2203 = vrot.slane %v2198, %v2202
  %v2205 = vadd.f32 %v2193, %v2203
  %v2206 = vadd.f32 %v2194, %v2203
  %v2207 = vadd.f32 %v2195, %v2203
  %v2208 = vadd.f32 %v2196, %v2203
  %v2209 = vmul.f32 %v2205, %v2205
  %v2210 = vmul.f32 %v2206, %v2206
  %v2211 = vmul.f32 %v2207, %v2207
  %v2212 = vmul.f32 %v2208, %v2208
  %v2213 = vsel %vm41, %v2209, 0.0
  %2214 = vadd.xlane.f32.xlu0 %v2213
  %v2215 = vpop.xlane.xlu0 %2214
  %v2216 = vsel %vm41, %v2210, 0.0
  %2217 = vadd.xlane.f32.xlu0 %v2216
  %v2218 = vpop.xlane.xlu0 %2217
  %v2219 = vsel %vm41, %v2211, 0.0
  %2220 = vadd.xlane.f32.xlu0 %v2219
  %v2221 = vpop.xlane.xlu0 %2220
  %v2222 = vsel %vm41, %v2212, 0.0
  %2223 = vadd.xlane.f32.xlu0 %v2222
  %v2224 = vpop.xlane.xlu0 %2223
  %v2225 = vmax.f32 %v2215, 1e-24
  %v2226 = vmax.f32 %v2218, 1e-24
  %v2227 = vmax.f32 %v2221, 1e-24
  %v2228 = vmax.f32 %v2224, 1e-24
  %v2229 = vrsqrt.pop %v2225
  %v2230 = vrsqrt.pop %v2226
  %v2231 = vrsqrt.pop %v2227
  %v2232 = vrsqrt.pop %v2228
  %v2233 = vmul.f32 %v2205, %v2229
  %v2234 = vmul.f32 %v2206, %v2230
  %v2235 = vmul.f32 %v2207, %v2231
  %v2236 = vmul.f32 %v2208, %v2232
  %vm2237 = vcmask 130048
  %2238 = vst.msk [vmem:[%s4] sm:$0xff] %vm2237, %v2233
  %2239 = vst.msk [vmem:[%s4 + $0x8] sm:$0xff] %vm2237, %v2234
  %2240 = vst.msk [vmem:[%s4 + $0x10] sm:$0xff] %vm2237, %v2235
  %2241 = vst.msk [vmem:[%s4 + $0x18] sm:$0xff] %vm2237, %v2236
  // Predicated region
  $region18: #{rgcn_forward.1} parent=0 // pred_check
    _
  $region19: #{rgcn_forward.1} parent=0 // pred_check_branch
    %2243 = sbr.rel (0) target = $region21
  $region20: #{rgcn_forward.1} parent=0 // pred_region
    _
  $region21: #{rgcn_forward.1} parent=0 // pred_fallthru
    _
  // Predicated region
  $region22: #{rgcn_forward.1} parent=0 // pred_check
    _
  $region23: #{rgcn_forward.1} parent=0 // pred_check_branch
    %2245 = sbr.rel (0) target = $region25
  $region24: #{rgcn_forward.1} parent=0 // pred_region
    _
  $region25: #{rgcn_forward.1} parent=0 // pred_fallthru
    _

</llo_original>
